<compile_context>
chip_gen: v7x
topology: tpu7x:2x2x1
jax: 0.10.0
libtpu: 0.0.40
codegen_flags: <defaults>
</compile_context>

<pallas_src>
import jax
import jax.numpy as jnp
from jax import lax
from jax.experimental import pallas as pl
from jax.experimental.pallas import tpu as pltpu

# ----------------------------- tiny config -----------------------------------
VOCAB = 128
HIDDEN = 64
N_HEADS = 4
HEAD_DIM = 16
N_KV_HEADS = 2
INTERMEDIATE = 128
N_LAYERS = 4                       # config.num_hidden_layers
N_KV_LAYERS = 2                    # config.num_key_value_layers (prefill layers)
N_SWIFTKV = N_LAYERS - N_KV_LAYERS
ROPE_THETA = 10000.0
RMS_EPS = 1e-6
DTYPE = jnp.bfloat16               # weights/activations; norm/softmax math in f32

GQA_GROUP = N_HEADS // N_KV_HEADS
Q_DIM = N_HEADS * HEAD_DIM         # 64
KV_DIM = N_KV_HEADS * HEAD_DIM     # 32
QKV_DIM = Q_DIM + 2 * KV_DIM       # 128 -> lane-dense fused QKV matmul output
GU_DIM = 2 * INTERMEDIATE          # 256 -> lane-dense fused gate|up output
KV_ALL = N_SWIFTKV * KV_DIM        # 64  -> concatenated swiftkv K (or V) width
KV_OUT = 2 * KV_ALL                # 128 -> lane-dense (K_all | V_all) output
HR_OUT = 2 * HIDDEN                # 128 -> lane-dense (hidden | residual) output
ROPE_HALF = HEAD_DIM // 2          # 8

# dtype-aware finite mask value (scores are f32 everywhere)
_MASK = float(jnp.finfo(jnp.float32).min) * 0.5

# Scoped-VMEM request.  Toy shapes use ~0.3 MiB; at production scale re-derive
# per chip generation (v5e/v6e: 128 MiB physical, v7x: only 64 MiB).
VMEM_LIMIT = 32 * 1024 * 1024


# --------------------------- in-kernel helpers --------------------------------
def _rms_norm_f32(x, w):
    # x: [T, H] f32, w: [1, H] f32
    var = jnp.mean(x * x, axis=-1, keepdims=True)
    return x * lax.rsqrt(var + RMS_EPS) * w


def _rope_roll(x, cos, sin_a, sin_b):
    """Neox rotary on a flat lane-dense [T, W] slab (W a multiple of HEAD_DIM).

    out = x*cos + roll(x, +h)*sin_a + roll(x, -h)*sin_b, with h = HEAD_DIM//2.
    The precomputed tables zero out every lane where the full-row roll crosses
    a 16-lane head-block boundary, so the net effect is a per-head rotate_half
    without any reshape / half-slice / lane-concat.  Identity lanes (cos=1,
    sin=0) pass through unchanged (used for the V region).
    """
    w = x.shape[-1]
    a = pltpu.roll(x, shift=ROPE_HALF, axis=1)      # a[j] = x[j - h]
    b = pltpu.roll(x, shift=w - ROPE_HALF, axis=1)  # b[j] = x[j + h]
    return x * cos + a * sin_a + b * sin_b


# --------------------- fused forward kernel (whole runner) ---------------------
def _fused_prefill_kernel(x0_ref, rope_qkv_ref, rope_sk_ref,
                          in_ln_ref, post_ln_ref,
                          w_qkv_ref, w_o_ref, w_gu_ref, w_down_ref,
                          ln_sk_ref, w_kv_sk_ref,
                          hr_out_ref, kv_out_ref,
                          h_scr, r_scr, attn_scr):
    f32 = jnp.float32
    layer = pl.program_id(0)
    n_layers = pl.num_programs(0)
    t = x0_ref.shape[0]

    # ---- first grid step: load embeddings into the carried VMEM state
    @pl.when(layer == 0)
    def _init():
        h_scr[...] = x0_ref[...].astype(f32)        # hidden = embeddings
        r_scr[...] = jnp.zeros_like(r_scr)          # residual = None -> 0

    # ---- fused residual add + input RMSNorm (vLLM fused-add-norm pattern)
    s1 = h_scr[...] + r_scr[...]
    x = _rms_norm_f32(s1, in_ln_ref[0]).astype(DTYPE)

    # ---- fused Q|K|V projection: one lane-dense [H, 128] matmul
    qkv = jnp.dot(x, w_qkv_ref[0], preferred_element_type=f32)   # [T, 128] f32

    # ---- RoPE on the whole slab: Q lanes rotated + 1/sqrt(d) scaled,
    #      K lanes rotated, V lanes identity.  Two XLU rolls, no reshapes.
    qkv = _rope_roll(qkv, rope_qkv_ref[0], rope_qkv_ref[1], rope_qkv_ref[2])

    q = qkv[:, :Q_DIM]
    k = qkv[:, Q_DIM:Q_DIM + KV_DIM]
    v = qkv[:, Q_DIM + KV_DIM:]

    # ---- causal GQA attention (dense [T,T] scores are fine at toy T)
    row = lax.broadcasted_iota(jnp.int32, (t, t), 0)
    col = lax.broadcasted_iota(jnp.int32, (t, t), 1)
    causal = col <= row
    for h in range(N_HEADS):
        kvh = h // GQA_GROUP
        qh = q[:, h * HEAD_DIM:(h + 1) * HEAD_DIM]
        kh = k[:, kvh * HEAD_DIM:(kvh + 1) * HEAD_DIM]
        vh = v[:, kvh * HEAD_DIM:(kvh + 1) * HEAD_DIM]
        sc = lax.dot_general(qh, kh, (((1,), (1,)), ((), ())),
                             preferred_element_type=f32)         # [T, T]
        sc = jnp.where(causal, sc, _MASK)
        m = jnp.max(sc, axis=-1, keepdims=True)
        p = jnp.exp(sc - m)
        denom = jnp.sum(p, axis=-1, keepdims=True)
        p = p * pl.reciprocal(denom, approx=True)                # EUP slot
        # write into a VMEM scratch lane-slice (no lane-axis concatenate)
        attn_scr[:, h * HEAD_DIM:(h + 1) * HEAD_DIM] = jnp.dot(
            p, vh, preferred_element_type=f32)

    attn_o = jnp.dot(attn_scr[...].astype(DTYPE), w_o_ref[0],
                     preferred_element_type=f32)

    # ---- fused residual add + post-attention RMSNorm
    s2 = s1 + attn_o
    x2 = _rms_norm_f32(s2, post_ln_ref[0]).astype(DTYPE)

    # ---- fused SwiGLU MLP: one [H, 2I] gate|up matmul + down projection
    gu = jnp.dot(x2, w_gu_ref[0], preferred_element_type=f32)
    gate = gu[:, :INTERMEDIATE]
    up = gu[:, INTERMEDIATE:]
    hmid = (gate * jax.nn.sigmoid(gate)) * up
    out = jnp.dot(hmid.astype(DTYPE), w_down_ref[0], preferred_element_type=f32)

    # ---- carry state in VMEM for the next layer (no HBM round trip)
    h_scr[...] = out
    r_scr[...] = s2

    # ---- last grid step: emit lane-dense outputs + SwiftKV K/V tail
    @pl.when(layer == n_layers - 1)
    def _finalize():
        hr_out_ref[:, :HIDDEN] = out.astype(hr_out_ref.dtype)   # hidden_states
        hr_out_ref[:, HIDDEN:] = s2.astype(hr_out_ref.dtype)    # residual

        # swiftkv_hidden_states = norm_swiftkv(hidden + residual)   (fused)
        x_sk = _rms_norm_f32(out + s2, ln_sk_ref[...]).astype(DTYPE)
        # all swiftkv layers' kv_proj in ONE lane-dense [H, 128] matmul whose
        # columns are pre-arranged [K_l0|K_l1|...|V_l0|V_l1|...] so the result
        # is already in the final torch.cat(dim=-1) layout.
        kv = jnp.dot(x_sk, w_kv_sk_ref[...], preferred_element_type=f32)
        # rotary applied to the K half only (identity tables on the V half);
        # the q fed to rotary_emb in the reference is a discarded empty tensor.
        kv = _rope_roll(kv, rope_sk_ref[0], rope_sk_ref[1], rope_sk_ref[2])
        kv_out_ref[...] = kv.astype(kv_out_ref.dtype)


def _forward_cost(t):
    per_layer_mm = (2 * t * HIDDEN * QKV_DIM + 2 * t * Q_DIM * HIDDEN
                    + 2 * t * HIDDEN * GU_DIM + 2 * t * INTERMEDIATE * HIDDEN)
    per_layer_attn = 4 * N_HEADS * t * t * HEAD_DIM
    tail_mm = 2 * t * HIDDEN * KV_OUT
    flops = N_KV_LAYERS * (per_layer_mm + per_layer_attn) + tail_mm
    trans = N_KV_LAYERS * (N_HEADS * t * t + t * INTERMEDIATE
                           + N_HEADS * t + 2 * t) + t
    weight_bytes = (2 * N_KV_LAYERS * (HIDDEN * QKV_DIM + Q_DIM * HIDDEN
                                       + HIDDEN * GU_DIM + INTERMEDIATE * HIDDEN
                                       + 8 * HIDDEN)
                    + 2 * HIDDEN * KV_OUT + 4 * HIDDEN)
    act_bytes = (2 * t * HIDDEN + 4 * 3 * t * (QKV_DIM + KV_OUT)
                 + 2 * t * (HR_OUT + KV_OUT))
    return pl.CostEstimate(flops=flops, transcendentals=trans,
                           bytes_accessed=weight_bytes + act_bytes)


# ------------------------ RoPE tables (built once, f32) ------------------------
def _rope_tables(positions):
    """Full-width cos / sinA / sinB tables for the roll-based rotary.

    Per 16-lane head block:  cos = [c | c],  sinA = [0 | s],  sinB = [-s | 0],
    identity block: cos = 1, sinA = sinB = 0.  Returned as two stacked
    [3, T, 128] f32 arrays: one for the decoder QKV slab (Q lanes also fold in
    the 1/sqrt(head_dim) score scale, V lanes identity) and one for the
    SwiftKV (K_all | V_all) slab (V half identity).
    """
    pos = positions.astype(jnp.float32)
    inv_freq = 1.0 / (ROPE_THETA ** (
        jnp.arange(0, HEAD_DIM, 2, dtype=jnp.float32) / HEAD_DIM))
    freqs = pos[:, None] * inv_freq[None, :]                 # [T, HEAD_DIM/2]
    c, s = jnp.cos(freqs), jnp.sin(freqs)
    z = jnp.zeros_like(s)

    cos_blk = jnp.concatenate([c, c], axis=-1)               # [T, 16]
    sina_blk = jnp.concatenate([z, s], axis=-1)              # mult. roll(+h)
    sinb_blk = jnp.concatenate([-s, z], axis=-1)             # mult. roll(-h)
    one_blk = jnp.ones_like(cos_blk)
    zero_blk = jnp.zeros_like(cos_blk)

    def tile(blk, n):
        return jnp.tile(blk, (1, n))

    scale = 1.0 / (HEAD_DIM ** 0.5)
    # decoder slab: [ Q (roped, scaled) | K (roped) | V (identity) ]
    cos_qkv = jnp.concatenate([tile(cos_blk, N_HEADS) * scale,
                               tile(cos_blk, N_KV_HEADS),
                               tile(one_blk, N_KV_HEADS)], axis=-1)
    sina_qkv = jnp.concatenate([tile(sina_blk, N_HEADS) * scale,
                                tile(sina_blk, N_KV_HEADS),
                                tile(zero_blk, N_KV_HEADS)], axis=-1)
    sinb_qkv = jnp.concatenate([tile(sinb_blk, N_HEADS) * scale,
                                tile(sinb_blk, N_KV_HEADS),
                                tile(zero_blk, N_KV_HEADS)], axis=-1)
    rope_qkv = jnp.stack([cos_qkv, sina_qkv, sinb_qkv])      # [3, T, 128] f32

    # swiftkv slab: [ K_all (roped) | V_all (identity) ]
    nk = N_SWIFTKV * N_KV_HEADS
    cos_sk = jnp.concatenate([tile(cos_blk, nk), tile(one_blk, nk)], axis=-1)
    sina_sk = jnp.concatenate([tile(sina_blk, nk), tile(zero_blk, nk)], axis=-1)
    sinb_sk = jnp.concatenate([tile(sinb_blk, nk), tile(zero_blk, nk)], axis=-1)
    rope_sk = jnp.stack([cos_sk, sina_sk, sinb_sk])          # [3, T, 128] f32
    return rope_qkv, rope_sk


# ------------------------------- forward wrapper -------------------------------
def prefill_runner_forward(params, input_ids, positions):
    hidden0 = params["embed"][input_ids]                     # get_input_embeddings
    rope_qkv, rope_sk = _rope_tables(positions)
    t = hidden0.shape[0]

    const2 = lambda l: (0, 0)
    const3 = lambda l: (0, 0, 0)
    per_layer3 = lambda l: (l, 0, 0)

    hr, kv = pl.pallas_call(
        _fused_prefill_kernel,
        out_shape=(jax.ShapeDtypeStruct((t, HR_OUT), DTYPE),
                   jax.ShapeDtypeStruct((t, KV_OUT), DTYPE)),
        grid_spec=pltpu.PrefetchScalarGridSpec(
            num_scalar_prefetch=0,
            grid=(N_KV_LAYERS,),
            in_specs=[
                pl.BlockSpec((t, HIDDEN), const2),                 # embeddings
                pl.BlockSpec((3, t, QKV_DIM), const3),             # rope (qkv)
                pl.BlockSpec((3, t, KV_OUT), const3),              # rope (swiftkv)
                pl.BlockSpec((1, 1, HIDDEN), per_layer3),          # input_ln
                pl.BlockSpec((1, 1, HIDDEN), per_layer3),          # post_ln
                pl.BlockSpec((1, HIDDEN, QKV_DIM), per_layer3),    # w_qkv
                pl.BlockSpec((1, Q_DIM, HIDDEN), per_layer3),      # w_o
                pl.BlockSpec((1, HIDDEN, GU_DIM), per_layer3),     # w_gate_up
                pl.BlockSpec((1, INTERMEDIATE, HIDDEN), per_layer3),  # w_down
                pl.BlockSpec((1, HIDDEN), const2),                 # norm_swiftkv
                pl.BlockSpec((HIDDEN, KV_OUT), const2),            # w_kv_swiftkv
            ],
            out_specs=[
                pl.BlockSpec((t, HR_OUT), const2),   # (hidden | residual)
                pl.BlockSpec((t, KV_OUT), const2),   # (K_all | V_all)
            ],
            scratch_shapes=[
                pltpu.VMEM((t, HIDDEN), jnp.float32),   # carried hidden
                pltpu.VMEM((t, HIDDEN), jnp.float32),   # carried residual
                pltpu.VMEM((t, Q_DIM), jnp.float32),    # per-head attn outputs
            ],
        ),
        compiler_params=pltpu.CompilerParams(
            dimension_semantics=("arbitrary",),     # layer axis is a sequential carry
            vmem_limit_bytes=VMEM_LIMIT),
        cost_estimate=_forward_cost(t),
    )(hidden0, rope_qkv, rope_sk,
      params["input_ln"], params["post_ln"],
      params["w_qkv"], params["w_o"], params["w_gate_up"], params["w_down"],
      params["norm_swiftkv"], params["w_kv_swiftkv"])

    hidden, residual = hr[:, :HIDDEN], hr[:, HIDDEN:]
    k_states, v_states = kv[:, :KV_ALL], kv[:, KV_ALL:]
    return hidden, residual, positions, k_states, v_states


# ------------------------------ parameter init ---------------------------------
def init_params(key):
    def w(k, shape):
        return (jax.random.normal(k, shape, jnp.float32) * 0.02).astype(DTYPE)

    def ln(k, shape):
        # RMSNorm weights kept f32 (tiny; avoids in-kernel upcast passes)
        return 1.0 + 0.1 * jax.random.normal(k, shape, jnp.float32)

    keys = iter(jax.random.split(key, 64))
    params = {
        "embed": w(next(keys), (VOCAB, HIDDEN)),
        "input_ln": ln(next(keys), (N_KV_LAYERS, 1, HIDDEN)),
        "post_ln": ln(next(keys), (N_KV_LAYERS, 1, HIDDEN)),
        "norm_swiftkv": ln(next(keys), (1, HIDDEN)),
    }
    w_qkv, w_o, w_gu, w_down = [], [], [], []
    for _ in range(N_KV_LAYERS):
        wq_ = w(next(keys), (HIDDEN, Q_DIM))
        wk_ = w(next(keys), (HIDDEN, KV_DIM))
        wv_ = w(next(keys), (HIDDEN, KV_DIM))
        wg_ = w(next(keys), (HIDDEN, INTERMEDIATE))
        wu_ = w(next(keys), (HIDDEN, INTERMEDIATE))
        w_qkv.append(jnp.concatenate([wq_, wk_, wv_], axis=1))    # [H, 128]
        w_o.append(w(next(keys), (Q_DIM, HIDDEN)))
        w_gu.append(jnp.concatenate([wg_, wu_], axis=1))          # [H, 256]
        w_down.append(w(next(keys), (INTERMEDIATE, HIDDEN)))
    params["w_qkv"] = jnp.stack(w_qkv)          # [L, H, 128]
    params["w_o"] = jnp.stack(w_o)              # [L, 64, H]
    params["w_gate_up"] = jnp.stack(w_gu)       # [L, H, 256]
    params["w_down"] = jnp.stack(w_down)        # [L, 128, H]

    # swiftkv kv_proj weights, columns re-laid out so one matmul yields
    # [k_l0 | k_l1 | ... | v_l0 | v_l1 | ...] directly (the cat(dim=-1) layout).
    wk_cols, wv_cols = [], []
    for _ in range(N_SWIFTKV):
        w_kv = w(next(keys), (HIDDEN, 2 * KV_DIM))
        wk_cols.append(w_kv[:, :KV_DIM])
        wv_cols.append(w_kv[:, KV_DIM:])
    params["w_kv_swiftkv"] = jnp.concatenate(wk_cols + wv_cols, axis=1)  # [H, 128]
    return params


# ---------------------- pure-JAX reference (for a sanity check) ----------------
def _reference_forward(params, input_ids, positions):
    f32 = jnp.float32
    half = HEAD_DIM // 2
    inv_freq = 1.0 / (ROPE_THETA ** (jnp.arange(0, HEAD_DIM, 2, dtype=f32) / HEAD_DIM))
    freqs = positions.astype(f32)[:, None] * inv_freq[None, :]
    cos = jnp.concatenate([jnp.cos(freqs)] * 2, axis=-1)
    sin = jnp.concatenate([jnp.sin(freqs)] * 2, axis=-1)

    def rope(x, n):
        t = x.shape[0]
        x3 = x.reshape(t, n, HEAD_DIM)
        x1, x2 = x3[..., :half], x3[..., half:]
        rot = jnp.concatenate([-x2, x1], axis=-1)
        return (x3 * cos[:, None, :] + rot * sin[:, None, :]).reshape(t, n * HEAD_DIM)

    def rmsn(x, w):
        var = jnp.mean(x * x, axis=-1, keepdims=True)
        return x * lax.rsqrt(var + RMS_EPS) * w

    hidden = params["embed"][input_ids].astype(f32)
    residual = jnp.zeros_like(hidden)
    t = hidden.shape[0]
    scale = 1.0 / (HEAD_DIM ** 0.5)
    causal = jnp.arange(t)[None, :] <= jnp.arange(t)[:, None]
    for i in range(N_KV_LAYERS):
        s1 = hidden + residual
        x = rmsn(s1, params["input_ln"][i, 0]).astype(DTYPE)
        qkv = jnp.dot(x, params["w_qkv"][i], preferred_element_type=f32)
        q, k, v = qkv[:, :Q_DIM], qkv[:, Q_DIM:Q_DIM + KV_DIM], qkv[:, Q_DIM + KV_DIM:]
        q, k = rope(q, N_HEADS), rope(k, N_KV_HEADS)
        outs = []
        for h in range(N_HEADS):
            kvh = h // GQA_GROUP
            qh = q[:, h * HEAD_DIM:(h + 1) * HEAD_DIM]
            kh = k[:, kvh * HEAD_DIM:(kvh + 1) * HEAD_DIM]
            vh = v[:, kvh * HEAD_DIM:(kvh + 1) * HEAD_DIM]
            sc = jnp.where(causal, (qh @ kh.T) * scale, -jnp.inf)
            outs.append(jax.nn.softmax(sc, axis=-1) @ vh)
        attn = jnp.concatenate(outs, axis=-1)
        attn_o = jnp.dot(attn.astype(DTYPE), params["w_o"][i], preferred_element_type=f32)
        s2 = s1 + attn_o
        x2 = rmsn(s2, params["post_ln"][i, 0]).astype(DTYPE)
        gu = jnp.dot(x2, params["w_gate_up"][i], preferred_element_type=f32)
        gate, up = gu[:, :INTERMEDIATE], gu[:, INTERMEDIATE:]
        hmid = gate * jax.nn.sigmoid(gate) * up
        hidden = jnp.dot(hmid.astype(DTYPE), params["w_down"][i], preferred_element_type=f32)
        residual = s2
    x_sk = rmsn(hidden + residual, params["norm_swiftkv"][0]).astype(DTYPE)
    kv = jnp.dot(x_sk, params["w_kv_swiftkv"], preferred_element_type=f32)
    k_all, v_all = kv[:, :KV_ALL], kv[:, KV_ALL:]
    k_all = rope(k_all, N_SWIFTKV * N_KV_HEADS)
    return hidden, residual, k_all, v_all


# ----------------------------------- main ---------------------------------------
if __name__ == "__main__":
    key = jax.random.PRNGKey(0)
    k_params, k_ids = jax.random.split(key)
    params = init_params(k_params)

    T = 8
    input_ids = jax.random.randint(k_ids, (T,), 0, VOCAB, dtype=jnp.int32)
    positions = jnp.arange(T, dtype=jnp.int32)

    outs = jax.jit(prefill_runner_forward)(params, input_ids, positions)
    jax.block_until_ready(outs)
    hidden, residual, pos_out, k_states, v_states = outs

    assert hidden.shape == (T, HIDDEN) and hidden.dtype == DTYPE
    assert residual.shape == (T, HIDDEN)
    assert pos_out.shape == (T,)
    assert k_states.shape == (T, KV_ALL) and v_states.shape == (T, KV_ALL)

    # numerical sanity check against a pure-JAX reference of the same forward
    r_h, r_r, r_k, r_v = _reference_forward(params, input_ids, positions)
    for got, ref in ((hidden, r_h), (residual, r_r),
                     (k_states, r_k), (v_states, r_v)):
        diff = float(jnp.max(jnp.abs(got.astype(jnp.float32) - ref.astype(jnp.float32))))
        assert diff < 3e-2, f"mismatch vs reference: {diff}"

    print("KERNEL_OK")
</pallas_src>

<mosaic_0001>
module attributes {stable_mosaic.version = 11 : i64} {
  func.func @_fused_prefill_kernel(%arg0: i32, %arg1: memref<8x64xbf16, #tpu.memory_space<vmem>>, %arg2: memref<3x8x128xf32, #tpu.memory_space<vmem>>, %arg3: memref<3x8x128xf32, #tpu.memory_space<vmem>>, %arg4: memref<1x1x64xf32, #tpu.memory_space<vmem>>, %arg5: memref<1x1x64xf32, #tpu.memory_space<vmem>>, %arg6: memref<1x64x128xbf16, #tpu.memory_space<vmem>>, %arg7: memref<1x64x64xbf16, #tpu.memory_space<vmem>>, %arg8: memref<1x64x256xbf16, #tpu.memory_space<vmem>>, %arg9: memref<1x128x64xbf16, #tpu.memory_space<vmem>>, %arg10: memref<1x64xf32, #tpu.memory_space<vmem>>, %arg11: memref<64x128xbf16, #tpu.memory_space<vmem>>, %arg12: memref<8x128xbf16, #tpu.memory_space<vmem>>, %arg13: memref<8x128xbf16, #tpu.memory_space<vmem>>, %arg14: memref<8x64xf32, #tpu.memory_space<vmem>>, %arg15: memref<8x64xf32, #tpu.memory_space<vmem>>, %arg16: memref<8x64xf32, #tpu.memory_space<vmem>>) attributes {dimension_semantics = [#tpu.dimension_semantics<arbitrary>], iteration_bounds = array<i64: 2>, scalar_prefetch = 0 : i64, scratch_operands = 3 : i64, tpu.core_type = #tpu.core_type<tc>, window_params = [{pipeline_mode = #tpu.pipeline_mode<synchronous>, transform_indices = @transform_0, window_bounds = array<i64: 8, 64>}, {pipeline_mode = #tpu.pipeline_mode<synchronous>, transform_indices = @transform_1, window_bounds = array<i64: 3, 8, 128>}, {pipeline_mode = #tpu.pipeline_mode<synchronous>, transform_indices = @transform_2, window_bounds = array<i64: 3, 8, 128>}, {transform_indices = @transform_3, window_bounds = array<i64: 1, 1, 64>}, {transform_indices = @transform_4, window_bounds = array<i64: 1, 1, 64>}, {transform_indices = @transform_5, window_bounds = array<i64: 1, 64, 128>}, {transform_indices = @transform_6, window_bounds = array<i64: 1, 64, 64>}, {transform_indices = @transform_7, window_bounds = array<i64: 1, 64, 256>}, {transform_indices = @transform_8, window_bounds = array<i64: 1, 128, 64>}, {pipeline_mode = #tpu.pipeline_mode<synchronous>, transform_indices = @transform_9, window_bounds = array<i64: 1, 64>}, {pipeline_mode = #tpu.pipeline_mode<synchronous>, transform_indices = @transform_10, window_bounds = array<i64: 64, 128>}, {pipeline_mode = #tpu.pipeline_mode<synchronous>, transform_indices = @transform_11, window_bounds = array<i64: 8, 128>}, {pipeline_mode = #tpu.pipeline_mode<synchronous>, transform_indices = @transform_12, window_bounds = array<i64: 8, 128>}]} {
    %c0_i32 = arith.constant 0 : i32
    %0 = arith.cmpi eq, %arg0, %c0_i32 : i32
    %1 = arith.extui %0 : i1 to i32
    %c0_i32_0 = arith.constant 0 : i32
    %2 = arith.cmpi ne, %1, %c0_i32_0 : i32
    scf.if %2 {
      %c0_71 = arith.constant 0 : index
      %c0_72 = arith.constant 0 : index
      %157 = vector.load %arg1[%c0_71, %c0_72] : memref<8x64xbf16, #tpu.memory_space<vmem>>, vector<8x64xbf16>
      %158 = arith.extf %157 : vector<8x64xbf16> to vector<8x64xf32>
      %c0_73 = arith.constant 0 : index
      %c0_74 = arith.constant 0 : index
      %159 = vector.load %arg14[%c0_73, %c0_74] : memref<8x64xf32, #tpu.memory_space<vmem>>, vector<8x64xf32>
      tpu.vector_store %arg14[%c0_73, %c0_74], %158 {strides = array<i32>} : memref<8x64xf32, #tpu.memory_space<vmem>>, vector<8x64xf32>,
      %cst_75 = arith.constant 0.000000e+00 : f32
      %160 = vector.broadcast %cst_75 : f32 to vector<8x64xf32>
      %c0_76 = arith.constant 0 : index
      %c0_77 = arith.constant 0 : index
      %161 = vector.load %arg15[%c0_76, %c0_77] : memref<8x64xf32, #tpu.memory_space<vmem>>, vector<8x64xf32>
      tpu.vector_store %arg15[%c0_76, %c0_77], %160 {strides = array<i32>} : memref<8x64xf32, #tpu.memory_space<vmem>>, vector<8x64xf32>,
    } else {
    }
    %c0 = arith.constant 0 : index
    %c0_1 = arith.constant 0 : index
    %3 = vector.load %arg14[%c0, %c0_1] : memref<8x64xf32, #tpu.memory_space<vmem>>, vector<8x64xf32>
    %c0_2 = arith.constant 0 : index
    %c0_3 = arith.constant 0 : index
    %4 = vector.load %arg15[%c0_2, %c0_3] : memref<8x64xf32, #tpu.memory_space<vmem>>, vector<8x64xf32>
    %5 = arith.addf %3, %4 : vector<8x64xf32>
    %c0_4 = arith.constant 0 : index
    %c0_5 = arith.constant 0 : index
    %c0_6 = arith.constant 0 : index
    %6 = vector.load %arg4[%c0_4, %c0_5, %c0_6] : memref<1x1x64xf32, #tpu.memory_space<vmem>>, vector<1x1x64xf32>
    %7 = vector.shape_cast %6 : vector<1x1x64xf32> to vector<1x64xf32>
    %8 = arith.mulf %5, %5 : vector<8x64xf32>
    %cst = arith.constant dense<0.000000e+00> : vector<8xf32>
    %9 = vector.multi_reduction <add>, %8, %cst [1] : vector<8x64xf32> to vector<8xf32>
    %10 = vector.shape_cast %9 : vector<8xf32> to vector<8x1xf32>
    %cst_7 = arith.constant 6.400000e+01 : f32
    %11 = vector.broadcast %cst_7 : f32 to vector<8x1xf32>
    %12 = arith.divf %10, %11 : vector<8x1xf32>
    %cst_8 = arith.constant 9.99999997E-7 : f32
    %13 = vector.broadcast %cst_8 : f32 to vector<8x1xf32>
    %14 = arith.addf %12, %13 : vector<8x1xf32>
    %15 = math.rsqrt %14 : vector<8x1xf32>
    %16 = vector.broadcast %15 : vector<8x1xf32> to vector<8x64xf32>
    %17 = arith.mulf %5, %16 : vector<8x64xf32>
    %18 = vector.broadcast %7 : vector<1x64xf32> to vector<8x64xf32>
    %19 = arith.mulf %17, %18 : vector<8x64xf32>
    %20 = arith.truncf %19 : vector<8x64xf32> to vector<8x64xbf16>
    %c0_9 = arith.constant 0 : index
    %c0_10 = arith.constant 0 : index
    %c0_11 = arith.constant 0 : index
    %21 = vector.load %arg6[%c0_9, %c0_10, %c0_11] : memref<1x64x128xbf16, #tpu.memory_space<vmem>>, vector<1x64x128xbf16>
    %22 = vector.shape_cast %21 : vector<1x64x128xbf16> to vector<64x128xbf16>
    %cst_12 = arith.constant dense<0.000000e+00> : vector<8x128xf32>
    %23 = tpu.matmul %20, %22, %cst_12 {dimension_numbers = #tpu.dot_dimension_numbers<[1], [0], [0], [1], [0, 0, 1, 1], [], []>} : vector<8x64xbf16>, vector<64x128xbf16>, vector<8x128xf32> -> vector<8x128xf32>
    %c0_13 = arith.constant 0 : index
    %c0_14 = arith.constant 0 : index
    %c0_15 = arith.constant 0 : index
    %24 = vector.load %arg2[%c0_13, %c0_14, %c0_15] : memref<3x8x128xf32, #tpu.memory_space<vmem>>, vector<1x8x128xf32>
    %25 = vector.shape_cast %24 : vector<1x8x128xf32> to vector<8x128xf32>
    %c1 = arith.constant 1 : index
    %c0_16 = arith.constant 0 : index
    %c0_17 = arith.constant 0 : index
    %26 = vector.load %arg2[%c1, %c0_16, %c0_17] : memref<3x8x128xf32, #tpu.memory_space<vmem>>, vector<1x8x128xf32>
    %27 = vector.shape_cast %26 : vector<1x8x128xf32> to vector<8x128xf32>
    %c2 = arith.constant 2 : index
    %c0_18 = arith.constant 0 : index
    %c0_19 = arith.constant 0 : index
    %28 = vector.load %arg2[%c2, %c0_18, %c0_19] : memref<3x8x128xf32, #tpu.memory_space<vmem>>, vector<1x8x128xf32>
    %29 = vector.shape_cast %28 : vector<1x8x128xf32> to vector<8x128xf32>
    %c8_i32 = arith.constant 8 : i32
    %30 = tpu.dynamic_rotate %23 by %c8_i32 dim 1 : vector<8x128xf32>, i32 -> vector<8x128xf32>
    %c120_i32 = arith.constant 120 : i32
    %31 = tpu.dynamic_rotate %23 by %c120_i32 dim 1 : vector<8x128xf32>, i32 -> vector<8x128xf32>
    %32 = arith.mulf %23, %25 : vector<8x128xf32>
    %33 = arith.mulf %30, %27 : vector<8x128xf32>
    %34 = arith.addf %32, %33 : vector<8x128xf32>
    %35 = arith.mulf %31, %29 : vector<8x128xf32>
    %36 = arith.addf %34, %35 : vector<8x128xf32>
    %37 = vector.extract_strided_slice %36 {offsets = [0, 0], sizes = [8, 64], strides = [1, 1]} : vector<8x128xf32> to vector<8x64xf32>
    %38 = vector.extract_strided_slice %36 {offsets = [0, 64], sizes = [8, 32], strides = [1, 1]} : vector<8x128xf32> to vector<8x32xf32>
    %39 = vector.extract_strided_slice %36 {offsets = [0, 96], sizes = [8, 32], strides = [1, 1]} : vector<8x128xf32> to vector<8x32xf32>
    %40 = tpu.iota {dimensions = array<i32: 0>} : vector<8x8xi32>
    %41 = tpu.iota {dimensions = array<i32: 1>} : vector<8x8xi32>
    %42 = arith.cmpi sle, %41, %40 : vector<8x8xi32>
    %43 = vector.extract_strided_slice %37 {offsets = [0, 0], sizes = [8, 16], strides = [1, 1]} : vector<8x64xf32> to vector<8x16xf32>
    %44 = vector.extract_strided_slice %38 {offsets = [0, 0], sizes = [8, 16], strides = [1, 1]} : vector<8x32xf32> to vector<8x16xf32>
    %45 = vector.extract_strided_slice %39 {offsets = [0, 0], sizes = [8, 16], strides = [1, 1]} : vector<8x32xf32> to vector<8x16xf32>
    %cst_20 = arith.constant dense<0.000000e+00> : vector<8x8xf32>
    %46 = tpu.matmul %43, %44, %cst_20 {dimension_numbers = #tpu.dot_dimension_numbers<[1], [1], [0], [0], [0, 0, 1, 0], [], []>} : vector<8x16xf32>, vector<8x16xf32>, vector<8x8xf32> -> vector<8x8xf32>
    %cst_21 = arith.constant -1.70141173E+38 : f32
    %47 = vector.broadcast %cst_21 : f32 to vector<8x8xf32>
    %48 = arith.select %42, %46, %47 : vector<8x8xi1>, vector<8x8xf32>
    %cst_22 = arith.constant dense<0xFF800000> : vector<8xf32>
    %49 = vector.multi_reduction <maximumf>, %48, %cst_22 [1] : vector<8x8xf32> to vector<8xf32>
    %50 = vector.shape_cast %49 : vector<8xf32> to vector<8x1xf32>
    %51 = vector.broadcast %50 : vector<8x1xf32> to vector<8x8xf32>
    %52 = arith.subf %48, %51 : vector<8x8xf32>
    %53 = math.exp %52 : vector<8x8xf32>
    %cst_23 = arith.constant dense<0.000000e+00> : vector<8xf32>
    %54 = vector.multi_reduction <add>, %53, %cst_23 [1] : vector<8x8xf32> to vector<8xf32>
    %55 = vector.shape_cast %54 : vector<8xf32> to vector<8x1xf32>
    %56 = tpu.reciprocal %55 {approx = true} : vector<8x1xf32> -> vector<8x1xf32>
    %57 = vector.broadcast %56 : vector<8x1xf32> to vector<8x8xf32>
    %58 = arith.mulf %53, %57 : vector<8x8xf32>
    %cst_24 = arith.constant dense<0.000000e+00> : vector<8x16xf32>
    %59 = tpu.matmul %58, %45, %cst_24 {dimension_numbers = #tpu.dot_dimension_numbers<[1], [0], [0], [1], [0, 0, 1, 1], [], []>} : vector<8x8xf32>, vector<8x16xf32>, vector<8x16xf32> -> vector<8x16xf32>
    %c0_25 = arith.constant 0 : index
    %c0_26 = arith.constant 0 : index
    %60 = vector.load %arg16[%c0_25, %c0_26] : memref<8x64xf32, #tpu.memory_space<vmem>>, vector<8x16xf32>
    tpu.vector_store %arg16[%c0_25, %c0_26], %59 {strides = array<i32>} : memref<8x64xf32, #tpu.memory_space<vmem>>, vector<8x16xf32>,
    %61 = vector.extract_strided_slice %37 {offsets = [0, 16], sizes = [8, 16], strides = [1, 1]} : vector<8x64xf32> to vector<8x16xf32>
    %62 = vector.extract_strided_slice %38 {offsets = [0, 0], sizes = [8, 16], strides = [1, 1]} : vector<8x32xf32> to vector<8x16xf32>
    %63 = vector.extract_strided_slice %39 {offsets = [0, 0], sizes = [8, 16], strides = [1, 1]} : vector<8x32xf32> to vector<8x16xf32>
    %cst_27 = arith.constant dense<0.000000e+00> : vector<8x8xf32>
    %64 = tpu.matmul %61, %62, %cst_27 {dimension_numbers = #tpu.dot_dimension_numbers<[1], [1], [0], [0], [0, 0, 1, 0], [], []>} : vector<8x16xf32>, vector<8x16xf32>, vector<8x8xf32> -> vector<8x8xf32>
    %cst_28 = arith.constant -1.70141173E+38 : f32
    %65 = vector.broadcast %cst_28 : f32 to vector<8x8xf32>
    %66 = arith.select %42, %64, %65 : vector<8x8xi1>, vector<8x8xf32>
    %cst_29 = arith.constant dense<0xFF800000> : vector<8xf32>
    %67 = vector.multi_reduction <maximumf>, %66, %cst_29 [1] : vector<8x8xf32> to vector<8xf32>
    %68 = vector.shape_cast %67 : vector<8xf32> to vector<8x1xf32>
    %69 = vector.broadcast %68 : vector<8x1xf32> to vector<8x8xf32>
    %70 = arith.subf %66, %69 : vector<8x8xf32>
    %71 = math.exp %70 : vector<8x8xf32>
    %cst_30 = arith.constant dense<0.000000e+00> : vector<8xf32>
    %72 = vector.multi_reduction <add>, %71, %cst_30 [1] : vector<8x8xf32> to vector<8xf32>
    %73 = vector.shape_cast %72 : vector<8xf32> to vector<8x1xf32>
    %74 = tpu.reciprocal %73 {approx = true} : vector<8x1xf32> -> vector<8x1xf32>
    %75 = vector.broadcast %74 : vector<8x1xf32> to vector<8x8xf32>
    %76 = arith.mulf %71, %75 : vector<8x8xf32>
    %cst_31 = arith.constant dense<0.000000e+00> : vector<8x16xf32>
    %77 = tpu.matmul %76, %63, %cst_31 {dimension_numbers = #tpu.dot_dimension_numbers<[1], [0], [0], [1], [0, 0, 1, 1], [], []>} : vector<8x8xf32>, vector<8x16xf32>, vector<8x16xf32> -> vector<8x16xf32>
    %c0_32 = arith.constant 0 : index
    %c16 = arith.constant 16 : index
    %78 = vector.load %arg16[%c0_32, %c16] : memref<8x64xf32, #tpu.memory_space<vmem>>, vector<8x16xf32>
    tpu.vector_store %arg16[%c0_32, %c16], %77 {strides = array<i32>} : memref<8x64xf32, #tpu.memory_space<vmem>>, vector<8x16xf32>,
    %79 = vector.extract_strided_slice %37 {offsets = [0, 32], sizes = [8, 16], strides = [1, 1]} : vector<8x64xf32> to vector<8x16xf32>
    %80 = vector.extract_strided_slice %38 {offsets = [0, 16], sizes = [8, 16], strides = [1, 1]} : vector<8x32xf32> to vector<8x16xf32>
    %81 = vector.extract_strided_slice %39 {offsets = [0, 16], sizes = [8, 16], strides = [1, 1]} : vector<8x32xf32> to vector<8x16xf32>
    %cst_33 = arith.constant dense<0.000000e+00> : vector<8x8xf32>
    %82 = tpu.matmul %79, %80, %cst_33 {dimension_numbers = #tpu.dot_dimension_numbers<[1], [1], [0], [0], [0, 0, 1, 0], [], []>} : vector<8x16xf32>, vector<8x16xf32>, vector<8x8xf32> -> vector<8x8xf32>
    %cst_34 = arith.constant -1.70141173E+38 : f32
    %83 = vector.broadcast %cst_34 : f32 to vector<8x8xf32>
    %84 = arith.select %42, %82, %83 : vector<8x8xi1>, vector<8x8xf32>
    %cst_35 = arith.constant dense<0xFF800000> : vector<8xf32>
    %85 = vector.multi_reduction <maximumf>, %84, %cst_35 [1] : vector<8x8xf32> to vector<8xf32>
    %86 = vector.shape_cast %85 : vector<8xf32> to vector<8x1xf32>
    %87 = vector.broadcast %86 : vector<8x1xf32> to vector<8x8xf32>
    %88 = arith.subf %84, %87 : vector<8x8xf32>
    %89 = math.exp %88 : vector<8x8xf32>
    %cst_36 = arith.constant dense<0.000000e+00> : vector<8xf32>
    %90 = vector.multi_reduction <add>, %89, %cst_36 [1] : vector<8x8xf32> to vector<8xf32>
    %91 = vector.shape_cast %90 : vector<8xf32> to vector<8x1xf32>
    %92 = tpu.reciprocal %91 {approx = true} : vector<8x1xf32> -> vector<8x1xf32>
    %93 = vector.broadcast %92 : vector<8x1xf32> to vector<8x8xf32>
    %94 = arith.mulf %89, %93 : vector<8x8xf32>
    %cst_37 = arith.constant dense<0.000000e+00> : vector<8x16xf32>
    %95 = tpu.matmul %94, %81, %cst_37 {dimension_numbers = #tpu.dot_dimension_numbers<[1], [0], [0], [1], [0, 0, 1, 1], [], []>} : vector<8x8xf32>, vector<8x16xf32>, vector<8x16xf32> -> vector<8x16xf32>
    %c0_38 = arith.constant 0 : index
    %c32 = arith.constant 32 : index
    %96 = vector.load %arg16[%c0_38, %c32] : memref<8x64xf32, #tpu.memory_space<vmem>>, vector<8x16xf32>
    tpu.vector_store %arg16[%c0_38, %c32], %95 {strides = array<i32>} : memref<8x64xf32, #tpu.memory_space<vmem>>, vector<8x16xf32>,
    %97 = vector.extract_strided_slice %37 {offsets = [0, 48], sizes = [8, 16], strides = [1, 1]} : vector<8x64xf32> to vector<8x16xf32>
    %98 = vector.extract_strided_slice %38 {offsets = [0, 16], sizes = [8, 16], strides = [1, 1]} : vector<8x32xf32> to vector<8x16xf32>
    %99 = vector.extract_strided_slice %39 {offsets = [0, 16], sizes = [8, 16], strides = [1, 1]} : vector<8x32xf32> to vector<8x16xf32>
    %cst_39 = arith.constant dense<0.000000e+00> : vector<8x8xf32>
    %100 = tpu.matmul %97, %98, %cst_39 {dimension_numbers = #tpu.dot_dimension_numbers<[1], [1], [0], [0], [0, 0, 1, 0], [], []>} : vector<8x16xf32>, vector<8x16xf32>, vector<8x8xf32> -> vector<8x8xf32>
    %cst_40 = arith.constant -1.70141173E+38 : f32
    %101 = vector.broadcast %cst_40 : f32 to vector<8x8xf32>
    %102 = arith.select %42, %100, %101 : vector<8x8xi1>, vector<8x8xf32>
    %cst_41 = arith.constant dense<0xFF800000> : vector<8xf32>
    %103 = vector.multi_reduction <maximumf>, %102, %cst_41 [1] : vector<8x8xf32> to vector<8xf32>
    %104 = vector.shape_cast %103 : vector<8xf32> to vector<8x1xf32>
    %105 = vector.broadcast %104 : vector<8x1xf32> to vector<8x8xf32>
    %106 = arith.subf %102, %105 : vector<8x8xf32>
    %107 = math.exp %106 : vector<8x8xf32>
    %cst_42 = arith.constant dense<0.000000e+00> : vector<8xf32>
    %108 = vector.multi_reduction <add>, %107, %cst_42 [1] : vector<8x8xf32> to vector<8xf32>
    %109 = vector.shape_cast %108 : vector<8xf32> to vector<8x1xf32>
    %110 = tpu.reciprocal %109 {approx = true} : vector<8x1xf32> -> vector<8x1xf32>
    %111 = vector.broadcast %110 : vector<8x1xf32> to vector<8x8xf32>
    %112 = arith.mulf %107, %111 : vector<8x8xf32>
    %cst_43 = arith.constant dense<0.000000e+00> : vector<8x16xf32>
    %113 = tpu.matmul %112, %99, %cst_43 {dimension_numbers = #tpu.dot_dimension_numbers<[1], [0], [0], [1], [0, 0, 1, 1], [], []>} : vector<8x8xf32>, vector<8x16xf32>, vector<8x16xf32> -> vector<8x16xf32>
    %c0_44 = arith.constant 0 : index
    %c48 = arith.constant 48 : index
    %114 = vector.load %arg16[%c0_44, %c48] : memref<8x64xf32, #tpu.memory_space<vmem>>, vector<8x16xf32>
    tpu.vector_store %arg16[%c0_44, %c48], %113 {strides = array<i32>} : memref<8x64xf32, #tpu.memory_space<vmem>>, vector<8x16xf32>,
    %c0_45 = arith.constant 0 : index
    %c0_46 = arith.constant 0 : index
    %115 = vector.load %arg16[%c0_45, %c0_46] : memref<8x64xf32, #tpu.memory_space<vmem>>, vector<8x64xf32>
    %116 = arith.truncf %115 : vector<8x64xf32> to vector<8x64xbf16>
    %c0_47 = arith.constant 0 : index
    %c0_48 = arith.constant 0 : index
    %c0_49 = arith.constant 0 : index
    %117 = vector.load %arg7[%c0_47, %c0_48, %c0_49] : memref<1x64x64xbf16, #tpu.memory_space<vmem>>, vector<1x64x64xbf16>
    %118 = vector.shape_cast %117 : vector<1x64x64xbf16> to vector<64x64xbf16>
    %cst_50 = arith.constant dense<0.000000e+00> : vector<8x64xf32>
    %119 = tpu.matmul %116, %118, %cst_50 {dimension_numbers = #tpu.dot_dimension_numbers<[1], [0], [0], [1], [0, 0, 1, 1], [], []>} : vector<8x64xbf16>, vector<64x64xbf16>, vector<8x64xf32> -> vector<8x64xf32>
    %120 = arith.addf %5, %119 : vector<8x64xf32>
    %c0_51 = arith.constant 0 : index
    %c0_52 = arith.constant 0 : index
    %c0_53 = arith.constant 0 : index
    %121 = vector.load %arg5[%c0_51, %c0_52, %c0_53] : memref<1x1x64xf32, #tpu.memory_space<vmem>>, vector<1x1x64xf32>
    %122 = vector.shape_cast %121 : vector<1x1x64xf32> to vector<1x64xf32>
    %123 = arith.mulf %120, %120 : vector<8x64xf32>
    %cst_54 = arith.constant dense<0.000000e+00> : vector<8xf32>
    %124 = vector.multi_reduction <add>, %123, %cst_54 [1] : vector<8x64xf32> to vector<8xf32>
    %125 = vector.shape_cast %124 : vector<8xf32> to vector<8x1xf32>
    %cst_55 = arith.constant 6.400000e+01 : f32
    %126 = vector.broadcast %cst_55 : f32 to vector<8x1xf32>
    %127 = arith.divf %125, %126 : vector<8x1xf32>
    %cst_56 = arith.constant 9.99999997E-7 : f32
    %128 = vector.broadcast %cst_56 : f32 to vector<8x1xf32>
    %129 = arith.addf %127, %128 : vector<8x1xf32>
    %130 = math.rsqrt %129 : vector<8x1xf32>
    %131 = vector.broadcast %130 : vector<8x1xf32> to vector<8x64xf32>
    %132 = arith.mulf %120, %131 : vector<8x64xf32>
    %133 = vector.broadcast %122 : vector<1x64xf32> to vector<8x64xf32>
    %134 = arith.mulf %132, %133 : vector<8x64xf32>
    %135 = arith.truncf %134 : vector<8x64xf32> to vector<8x64xbf16>
    %c0_57 = arith.constant 0 : index
    %c0_58 = arith.constant 0 : index
    %c0_59 = arith.constant 0 : index
    %136 = vector.load %arg8[%c0_57, %c0_58, %c0_59] : memref<1x64x256xbf16, #tpu.memory_space<vmem>>, vector<1x64x256xbf16>
    %137 = vector.shape_cast %136 : vector<1x64x256xbf16> to vector<64x256xbf16>
    %cst_60 = arith.constant dense<0.000000e+00> : vector<8x256xf32>
    %138 = tpu.matmul %135, %137, %cst_60 {dimension_numbers = #tpu.dot_dimension_numbers<[1], [0], [0], [1], [0, 0, 1, 1], [], []>} : vector<8x64xbf16>, vector<64x256xbf16>, vector<8x256xf32> -> vector<8x256xf32>
    %139 = vector.extract_strided_slice %138 {offsets = [0, 0], sizes = [8, 128], strides = [1, 1]} : vector<8x256xf32> to vector<8x128xf32>
    %140 = vector.extract_strided_slice %138 {offsets = [0, 128], sizes = [8, 128], strides = [1, 1]} : vector<8x256xf32> to vector<8x128xf32>
    %141 = arith.negf %139 : vector<8x128xf32>
    %142 = math.exp %141 : vector<8x128xf32>
    %cst_61 = arith.constant 1.000000e+00 : f32
    %143 = vector.broadcast %cst_61 : f32 to vector<8x128xf32>
    %144 = arith.addf %143, %142 : vector<8x128xf32>
    %145 = arith.divf %143, %144 : vector<8x128xf32>
    %146 = arith.mulf %139, %145 : vector<8x128xf32>
    %147 = arith.mulf %146, %140 : vector<8x128xf32>
    %148 = arith.truncf %147 : vector<8x128xf32> to vector<8x128xbf16>
    %c0_62 = arith.constant 0 : index
    %c0_63 = arith.constant 0 : index
    %c0_64 = arith.constant 0 : index
    %149 = vector.load %arg9[%c0_62, %c0_63, %c0_64] : memref<1x128x64xbf16, #tpu.memory_space<vmem>>, vector<1x128x64xbf16>
    %150 = vector.shape_cast %149 : vector<1x128x64xbf16> to vector<128x64xbf16>
    %cst_65 = arith.constant dense<0.000000e+00> : vector<8x64xf32>
    %151 = tpu.matmul %148, %150, %cst_65 {dimension_numbers = #tpu.dot_dimension_numbers<[1], [0], [0], [1], [0, 0, 1, 1], [], []>} : vector<8x128xbf16>, vector<128x64xbf16>, vector<8x64xf32> -> vector<8x64xf32>
    %c0_66 = arith.constant 0 : index
    %c0_67 = arith.constant 0 : index
    %152 = vector.load %arg14[%c0_66, %c0_67] : memref<8x64xf32, #tpu.memory_space<vmem>>, vector<8x64xf32>
    tpu.vector_store %arg14[%c0_66, %c0_67], %151 {strides = array<i32>} : memref<8x64xf32, #tpu.memory_space<vmem>>, vector<8x64xf32>,
    %c0_68 = arith.constant 0 : index
    %c0_69 = arith.constant 0 : index
    %153 = vector.load %arg15[%c0_68, %c0_69] : memref<8x64xf32, #tpu.memory_space<vmem>>, vector<8x64xf32>
    tpu.vector_store %arg15[%c0_68, %c0_69], %120 {strides = array<i32>} : memref<8x64xf32, #tpu.memory_space<vmem>>, vector<8x64xf32>,
    %c1_i32 = arith.constant 1 : i32
    %154 = arith.cmpi eq, %arg0, %c1_i32 : i32
    %155 = arith.extui %154 : i1 to i32
    %c0_i32_70 = arith.constant 0 : i32
    %156 = arith.cmpi ne, %155, %c0_i32_70 : i32
    scf.if %156 {
      %157 = arith.truncf %151 : vector<8x64xf32> to vector<8x64xbf16>
      %c0_71 = arith.constant 0 : index
      %c0_72 = arith.constant 0 : index
      %158 = vector.load %arg12[%c0_71, %c0_72] : memref<8x128xbf16, #tpu.memory_space<vmem>>, vector<8x64xbf16>
      tpu.vector_store %arg12[%c0_71, %c0_72], %157 {strides = array<i32>} : memref<8x128xbf16, #tpu.memory_space<vmem>>, vector<8x64xbf16>,
      %159 = arith.truncf %120 : vector<8x64xf32> to vector<8x64xbf16>
      %c0_73 = arith.constant 0 : index
      %c64 = arith.constant 64 : index
      %160 = vector.load %arg12[%c0_73, %c64] : memref<8x128xbf16, #tpu.memory_space<vmem>>, vector<8x64xbf16>
      tpu.vector_store %arg12[%c0_73, %c64], %159 {strides = array<i32>} : memref<8x128xbf16, #tpu.memory_space<vmem>>, vector<8x64xbf16>,
      %161 = arith.addf %151, %120 : vector<8x64xf32>
      %c0_74 = arith.constant 0 : index
      %c0_75 = arith.constant 0 : index
      %162 = vector.load %arg10[%c0_74, %c0_75] : memref<1x64xf32, #tpu.memory_space<vmem>>, vector<1x64xf32>
      %163 = arith.mulf %161, %161 : vector<8x64xf32>
      %cst_76 = arith.constant dense<0.000000e+00> : vector<8xf32>
      %164 = vector.multi_reduction <add>, %163, %cst_76 [1] : vector<8x64xf32> to vector<8xf32>
      %165 = vector.shape_cast %164 : vector<8xf32> to vector<8x1xf32>
      %cst_77 = arith.constant 6.400000e+01 : f32
      %166 = vector.broadcast %cst_77 : f32 to vector<8x1xf32>
      %167 = arith.divf %165, %166 : vector<8x1xf32>
      %cst_78 = arith.constant 9.99999997E-7 : f32
      %168 = vector.broadcast %cst_78 : f32 to vector<8x1xf32>
      %169 = arith.addf %167, %168 : vector<8x1xf32>
      %170 = math.rsqrt %169 : vector<8x1xf32>
      %171 = vector.broadcast %170 : vector<8x1xf32> to vector<8x64xf32>
      %172 = arith.mulf %161, %171 : vector<8x64xf32>
      %173 = vector.broadcast %162 : vector<1x64xf32> to vector<8x64xf32>
      %174 = arith.mulf %172, %173 : vector<8x64xf32>
      %175 = arith.truncf %174 : vector<8x64xf32> to vector<8x64xbf16>
      %c0_79 = arith.constant 0 : index
      %c0_80 = arith.constant 0 : index
      %176 = vector.load %arg11[%c0_79, %c0_80] : memref<64x128xbf16, #tpu.memory_space<vmem>>, vector<64x128xbf16>
      %cst_81 = arith.constant dense<0.000000e+00> : vector<8x128xf32>
      %177 = tpu.matmul %175, %176, %cst_81 {dimension_numbers = #tpu.dot_dimension_numbers<[1], [0], [0], [1], [0, 0, 1, 1], [], []>} : vector<8x64xbf16>, vector<64x128xbf16>, vector<8x128xf32> -> vector<8x128xf32>
      %c0_82 = arith.constant 0 : index
      %c0_83 = arith.constant 0 : index
      %c0_84 = arith.constant 0 : index
      %178 = vector.load %arg3[%c0_82, %c0_83, %c0_84] : memref<3x8x128xf32, #tpu.memory_space<vmem>>, vector<1x8x128xf32>
      %179 = vector.shape_cast %178 : vector<1x8x128xf32> to vector<8x128xf32>
      %c1_85 = arith.constant 1 : index
      %c0_86 = arith.constant 0 : index
      %c0_87 = arith.constant 0 : index
      %180 = vector.load %arg3[%c1_85, %c0_86, %c0_87] : memref<3x8x128xf32, #tpu.memory_space<vmem>>, vector<1x8x128xf32>
      %181 = vector.shape_cast %180 : vector<1x8x128xf32> to vector<8x128xf32>
      %c2_88 = arith.constant 2 : index
      %c0_89 = arith.constant 0 : index
      %c0_90 = arith.constant 0 : index
      %182 = vector.load %arg3[%c2_88, %c0_89, %c0_90] : memref<3x8x128xf32, #tpu.memory_space<vmem>>, vector<1x8x128xf32>
      %183 = vector.shape_cast %182 : vector<1x8x128xf32> to vector<8x128xf32>
      %c8_i32_91 = arith.constant 8 : i32
      %184 = tpu.dynamic_rotate %177 by %c8_i32_91 dim 1 : vector<8x128xf32>, i32 -> vector<8x128xf32>
      %c120_i32_92 = arith.constant 120 : i32
      %185 = tpu.dynamic_rotate %177 by %c120_i32_92 dim 1 : vector<8x128xf32>, i32 -> vector<8x128xf32>
      %186 = arith.mulf %177, %179 : vector<8x128xf32>
      %187 = arith.mulf %184, %181 : vector<8x128xf32>
      %188 = arith.addf %186, %187 : vector<8x128xf32>
      %189 = arith.mulf %185, %183 : vector<8x128xf32>
      %190 = arith.addf %188, %189 : vector<8x128xf32>
      %191 = arith.truncf %190 : vector<8x128xf32> to vector<8x128xbf16>
      %c0_93 = arith.constant 0 : index
      %c0_94 = arith.constant 0 : index
      %192 = vector.load %arg13[%c0_93, %c0_94] : memref<8x128xbf16, #tpu.memory_space<vmem>>, vector<8x128xbf16>
      tpu.vector_store %arg13[%c0_93, %c0_94], %191 {strides = array<i32>} : memref<8x128xbf16, #tpu.memory_space<vmem>>, vector<8x128xbf16>,
    } else {
    }
    return
  }
  func.func @transform_0(%arg0: i32) -> (i32, i32) {
    %c0_i32 = arith.constant 0 : i32
    %c0_i32_0 = arith.constant 0 : i32
    %c0_i32_1 = arith.constant 0 : i32
    return %c0_i32, %c0_i32_0 : i32, i32
  }
  func.func @transform_1(%arg0: i32) -> (i32, i32, i32) {
    %c0_i32 = arith.constant 0 : i32
    %c0_i32_0 = arith.constant 0 : i32
    %c0_i32_1 = arith.constant 0 : i32
    %c0_i32_2 = arith.constant 0 : i32
    return %c0_i32, %c0_i32_0, %c0_i32_1 : i32, i32, i32
  }
  func.func @transform_2(%arg0: i32) -> (i32, i32, i32) {
    %c0_i32 = arith.constant 0 : i32
    %c0_i32_0 = arith.constant 0 : i32
    %c0_i32_1 = arith.constant 0 : i32
    %c0_i32_2 = arith.constant 0 : i32
    return %c0_i32, %c0_i32_0, %c0_i32_1 : i32, i32, i32
  }
  func.func @transform_3(%arg0: i32) -> (i32, i32, i32) {
    %c0_i32 = arith.constant 0 : i32
    %c0_i32_0 = arith.constant 0 : i32
    %c0_i32_1 = arith.constant 0 : i32
    return %arg0, %c0_i32, %c0_i32_0 : i32, i32, i32
  }
  func.func @transform_4(%arg0: i32) -> (i32, i32, i32) {
    %c0_i32 = arith.constant 0 : i32
    %c0_i32_0 = arith.constant 0 : i32
    %c0_i32_1 = arith.constant 0 : i32
    return %arg0, %c0_i32, %c0_i32_0 : i32, i32, i32
  }
  func.func @transform_5(%arg0: i32) -> (i32, i32, i32) {
    %c0_i32 = arith.constant 0 : i32
    %c0_i32_0 = arith.constant 0 : i32
    %c0_i32_1 = arith.constant 0 : i32
    return %arg0, %c0_i32, %c0_i32_0 : i32, i32, i32
  }
  func.func @transform_6(%arg0: i32) -> (i32, i32, i32) {
    %c0_i32 = arith.constant 0 : i32
    %c0_i32_0 = arith.constant 0 : i32
    %c0_i32_1 = arith.constant 0 : i32
    return %arg0, %c0_i32, %c0_i32_0 : i32, i32, i32
  }
  func.func @transform_7(%arg0: i32) -> (i32, i32, i32) {
    %c0_i32 = arith.constant 0 : i32
    %c0_i32_0 = arith.constant 0 : i32
    %c0_i32_1 = arith.constant 0 : i32
    return %arg0, %c0_i32, %c0_i32_0 : i32, i32, i32
  }
  func.func @transform_8(%arg0: i32) -> (i32, i32, i32) {
    %c0_i32 = arith.constant 0 : i32
    %c0_i32_0 = arith.constant 0 : i32
    %c0_i32_1 = arith.constant 0 : i32
    return %arg0, %c0_i32, %c0_i32_0 : i32, i32, i32
  }
  func.func @transform_9(%arg0: i32) -> (i32, i32) {
    %c0_i32 = arith.constant 0 : i32
    %c0_i32_0 = arith.constant 0 : i32
    %c0_i32_1 = arith.constant 0 : i32
    return %c0_i32, %c0_i32_0 : i32, i32
  }
  func.func @transform_10(%arg0: i32) -> (i32, i32) {
    %c0_i32 = arith.constant 0 : i32
    %c0_i32_0 = arith.constant 0 : i32
    %c0_i32_1 = arith.constant 0 : i32
    return %c0_i32, %c0_i32_0 : i32, i32
  }
  func.func @transform_11(%arg0: i32) -> (i32, i32) {
    %c0_i32 = arith.constant 0 : i32
    %c0_i32_0 = arith.constant 0 : i32
    %c0_i32_1 = arith.constant 0 : i32
    return %c0_i32, %c0_i32_0 : i32, i32
  }
  func.func @transform_12(%arg0: i32) -> (i32, i32) {
    %c0_i32 = arith.constant 0 : i32
    %c0_i32_0 = arith.constant 0 : i32
    %c0_i32_1 = arith.constant 0 : i32
    return %c0_i32, %c0_i32_0 : i32, i32
  }
}

</mosaic_0001>

<llo_original>
// kernel: tile.68
$region0: #{tile.68}
  %s0 = inlined_call_operand.vmem [shape: f32[8,2,16], index: 0, kind: input, shape index: {}]
  %s1 = inlined_call_operand.vmem [shape: f32[8,32], index: 1, kind: output, shape index: {}]
  $region1: #{tile.68} parent=0
    #allocation0 [shape = 'u8[32768]{0}', space=vmem, size = 0x8000, scoped, tag = 'scoped mem for input reshape']
    %s3 = sshllo.u32 0, 2
    %s4 = smul.addr 2, 7
    %s5 = scalar_lea.vmem %s0, %s4
    %v6 = vld [vmem:[%s5] sm:%s3]
    %s7 = scalar_lea.vmem [#allocation0], 56
    %8 = vst [vmem:[%s7] sm:%s3] %v6
    %s9 = smul.addr 2, 6
    %s10 = scalar_lea.vmem %s0, %s9
    %v11 = vld [vmem:[%s10] sm:%s3]
    %s12 = scalar_lea.vmem [#allocation0], 48
    %13 = vst [vmem:[%s12] sm:%s3] %v11
    %s14 = smul.addr 2, 5
    %s15 = scalar_lea.vmem %s0, %s14
    %v16 = vld [vmem:[%s15] sm:%s3]
    %s17 = scalar_lea.vmem [#allocation0], 40
    %18 = vst [vmem:[%s17] sm:%s3] %v16
    %s19 = smul.addr 2, 4
    %s20 = scalar_lea.vmem %s0, %s19
    %v21 = vld [vmem:[%s20] sm:%s3]
    %s22 = scalar_lea.vmem [#allocation0], 32
    %23 = vst [vmem:[%s22] sm:%s3] %v21
    %s24 = smul.addr 2, 3
    %s25 = scalar_lea.vmem %s0, %s24
    %v26 = vld [vmem:[%s25] sm:%s3]
    %s27 = scalar_lea.vmem [#allocation0], 24
    %28 = vst [vmem:[%s27] sm:%s3] %v26
    %s29 = smul.addr 2, 2
    %s30 = scalar_lea.vmem %s0, %s29
    %v31 = vld [vmem:[%s30] sm:%s3]
    %s32 = scalar_lea.vmem [#allocation0], 16
    %33 = vst [vmem:[%s32] sm:%s3] %v31
    %s34 = scalar_lea.vmem %s0, 2
    %v35 = vld [vmem:[%s34] sm:%s3]
    %s36 = scalar_lea.vmem [#allocation0], 8
    %37 = vst [vmem:[%s36] sm:%s3] %v35
    %v38 = vld [vmem:[%s0] sm:%s3]
    %39 = vst [vmem:[#allocation0] sm:%s3] %v38
    %v40 = vld [vmem:[#allocation0] ss:$8 sm:$0xf]
    %v41 = vld [vmem:[#allocation0] ss:$8 sm:$0xf0]
    %vm42 = vcmask 1047556
    %v43 = vsel %vm42, %v41, %v40
    %vm44 = vcmask 130048
    %45 = vst.msk [vmem:[%s1] sm:$0xff] %vm44, %v43
    %s46 = scalar_lea.vmem [#allocation0], 1
    %v47 = vld [vmem:[%s46] ss:$8 sm:$0xf]
    %s48 = scalar_lea.vmem [#allocation0], 1
    %v49 = vld [vmem:[%s48] ss:$8 sm:$0xf0]
    %vm50 = vcmask 1047556
    %v51 = vsel %vm50, %v49, %v47
    %52 = vrot.lane.b32.xlu0 %v51, 16
    %v53 = vpop.permute.xlu0 %52
    %vm54 = vcmask 261248
    %55 = vst.msk [vmem:[%s1] sm:$0xff] %vm54, %v53

// kernel: tile.73
$region0: #{tile.73}
  %s0 = inlined_call_operand.vmem [shape: f32[8,4,16], index: 0, kind: input, shape index: {}]
  %s1 = inlined_call_operand.vmem [shape: f32[8,64], index: 1, kind: output, shape index: {}]
  $region1: #{tile.73} parent=0
    #allocation0 [shape = 'u8[32768]{0}', space=vmem, size = 0x8000, scoped, tag = 'scoped mem for input reshape']
    %s3 = sshllo.u32 0, 4
    %s4 = smul.addr 4, 7
    %s5 = scalar_lea.vmem %s0, %s4
    %v6 = vld [vmem:[%s5] sm:%s3]
    %s7 = scalar_lea.vmem [#allocation0], 56
    %8 = vst [vmem:[%s7] sm:%s3] %v6
    %s9 = smul.addr 4, 6
    %s10 = scalar_lea.vmem %s0, %s9
    %v11 = vld [vmem:[%s10] sm:%s3]
    %s12 = scalar_lea.vmem [#allocation0], 48
    %13 = vst [vmem:[%s12] sm:%s3] %v11
    %s14 = smul.addr 4, 5
    %s15 = scalar_lea.vmem %s0, %s14
    %v16 = vld [vmem:[%s15] sm:%s3]
    %s17 = scalar_lea.vmem [#allocation0], 40
    %18 = vst [vmem:[%s17] sm:%s3] %v16
    %s19 = smul.addr 4, 4
    %s20 = scalar_lea.vmem %s0, %s19
    %v21 = vld [vmem:[%s20] sm:%s3]
    %s22 = scalar_lea.vmem [#allocation0], 32
    %23 = vst [vmem:[%s22] sm:%s3] %v21
    %s24 = smul.addr 4, 3
    %s25 = scalar_lea.vmem %s0, %s24
    %v26 = vld [vmem:[%s25] sm:%s3]
    %s27 = scalar_lea.vmem [#allocation0], 24
    %28 = vst [vmem:[%s27] sm:%s3] %v26
    %s29 = smul.addr 4, 2
    %s30 = scalar_lea.vmem %s0, %s29
    %v31 = vld [vmem:[%s30] sm:%s3]
    %s32 = scalar_lea.vmem [#allocation0], 16
    %33 = vst [vmem:[%s32] sm:%s3] %v31
    %s34 = scalar_lea.vmem %s0, 4
    %v35 = vld [vmem:[%s34] sm:%s3]
    %s36 = scalar_lea.vmem [#allocation0], 8
    %37 = vst [vmem:[%s36] sm:%s3] %v35
    %v38 = vld [vmem:[%s0] sm:%s3]
    %39 = vst [vmem:[#allocation0] sm:%s3] %v38
    %v40 = vld [vmem:[#allocation0] ss:$8 sm:$0xf]
    %v41 = vld [vmem:[#allocation0] ss:$8 sm:$0xf0]
    %vm42 = vcmask 1047556
    %v43 = vsel %vm42, %v41, %v40
    %vm44 = vcmask 130048
    %45 = vst.msk [vmem:[%s1] sm:$0xff] %vm44, %v43
    %s46 = scalar_lea.vmem [#allocation0], 3
    %v47 = vld [vmem:[%s46] ss:$8 sm:$0xf]
    %s48 = scalar_lea.vmem [#allocation0], 3
    %v49 = vld [vmem:[%s48] ss:$8 sm:$0xf0]
    %vm50 = vcmask 1047556
    %v51 = vsel %vm50, %v49, %v47
    %52 = vrot.lane.b32.xlu0 %v51, 48
    %v53 = vpop.permute.xlu0 %52
    %vm54 = vcmask 523648
    %55 = vst.msk [vmem:[%s1] sm:$0xff] %vm54, %v53
    %s56 = scalar_lea.vmem [#allocation0], 2
    %v57 = vld [vmem:[%s56] ss:$8 sm:$0xf]
    %s58 = scalar_lea.vmem [#allocation0], 2
    %v59 = vld [vmem:[%s58] ss:$8 sm:$0xf0]
    %vm60 = vcmask 1047556
    %v61 = vsel %vm60, %v59, %v57
    %62 = vrot.lane.b32.xlu0 %v61, 32
    %v63 = vpop.permute.xlu0 %62
    %vm64 = vcmask 392448
    %65 = vst.msk [vmem:[%s1] sm:$0xff] %vm64, %v63
    %s66 = scalar_lea.vmem [#allocation0], 1
    %v67 = vld [vmem:[%s66] ss:$8 sm:$0xf]
    %s68 = scalar_lea.vmem [#allocation0], 1
    %v69 = vld [vmem:[%s68] ss:$8 sm:$0xf0]
    %vm70 = vcmask 1047556
    %v71 = vsel %vm70, %v69, %v67
    %72 = vrot.lane.b32.xlu0 %v71, 16
    %v73 = vpop.permute.xlu0 %72
    %vm74 = vcmask 261248
    %75 = vst.msk [vmem:[%s1] sm:$0xff] %vm74, %v73

// kernel: prefill_runner_forward.1
$region0: #{prefill_runner_forward.1}
  #allocation0 [shape = 'u32[]', space=smem, size = 0x4, offset = 0x4, fixed_abs, tag = 'smem constant byte address 0x4 - core index']
  #allocation1 [shape = 'u32[144,128]{1,0:T(1,128)}', space=vmem, size = 0x12000, scoped, tag = 'internal scratch']
  #allocation2 [shape = 'f32[8,64]{1,0:T(8,128)}', space=vmem, size = 0x1000, scoped, tag = 'scratch operand']
  #allocation3 [shape = 'f32[8,64]{1,0:T(8,128)}', space=vmem, size = 0x1000, scoped, tag = 'scratch operand']
  #allocation4 [shape = 'f32[8,64]{1,0:T(8,128)}', space=vmem, size = 0x1000, scoped, tag = 'scratch operand']
  %s0 = inlined_call_operand.vmem [shape: bf16[8,64], index: 0, kind: input, shape index: {}]
  %s1 = inlined_call_operand.vmem [shape: f32[3,8,128], index: 1, kind: input, shape index: {}]
  %s2 = inlined_call_operand.vmem [shape: f32[3,8,128], index: 2, kind: input, shape index: {}]
  %s3 = inlined_call_operand.vmem [shape: f32[2,1,64], index: 3, kind: input, shape index: {}]
  %s4 = inlined_call_operand.vmem [shape: f32[2,1,64], index: 4, kind: input, shape index: {}]
  %s5 = inlined_call_operand.vmem [shape: bf16[2,64,128], index: 5, kind: input, shape index: {}]
  %s6 = inlined_call_operand.vmem [shape: bf16[2,64,64], index: 6, kind: input, shape index: {}]
  %s7 = inlined_call_operand.vmem [shape: bf16[2,64,256], index: 7, kind: input, shape index: {}]
  %s8 = inlined_call_operand.vmem [shape: bf16[2,128,64], index: 8, kind: input, shape index: {}]
  %s9 = inlined_call_operand.vmem [shape: f32[1,64], index: 9, kind: input, shape index: {}]
  %s10 = inlined_call_operand.vmem [shape: bf16[64,128], index: 10, kind: input, shape index: {}]
  %s11 = inlined_call_operand.vmem [shape: bf16[8,128], index: 11, kind: output, shape index: {0}]
  %s12 = inlined_call_operand.vmem [shape: bf16[8,128], index: 12, kind: output, shape index: {1}]
  %13 = xla_tuple %s11, %s12
  %s14 = sld [smem:[#allocation0]]
  $region93: #{prefill_runner_forward.1} parent=0
    _
  %s16 = ssub.s32 1, %s14
  %s17 = scalar_select 0, %s16, %s14
  loop: start=0, step=1, limit=4
  $region2: #{prefill_runner_forward.1} parent=0 // loop_pre_header
    _
  $region3: #{prefill_runner_forward.1} parent=0 // loop_header
    %s19 = sphi 0, %s23
    %p20 = scmp.ge.s32.totalorder %s19, 4
    %s27 = sphi 0, %s27
    %s29 = sphi 0, %s27
    %s30 = sphi 0, %s29
    %s44 = sphi 0, %s30
    %s48 = sphi 0, %s48
    %s50 = sphi 0, %s48
    %s51 = sphi 0, %s50
    %s65 = sphi 0, %s51
    %s69 = sphi 0, %s69
    %s71 = sphi 0, %s69
    %s72 = sphi 0, %s71
    %s86 = sphi 0, %s72
    %s92 = sphi 0, %s94
    %s95 = sphi 0, %s92
    %s96 = sphi 0, %s95
    %s112 = sphi 0, %s96
    %s118 = sphi 0, %s120
    %s121 = sphi 0, %s118
    %s122 = sphi 0, %s121
    %s138 = sphi 0, %s122
    %s144 = sphi 0, %s146
    %s147 = sphi 0, %s144
    %s148 = sphi 0, %s147
    %s164 = sphi 0, %s148
    %s170 = sphi 0, %s172
    %s173 = sphi 0, %s170
    %s174 = sphi 0, %s173
    %s190 = sphi 0, %s174
    %s196 = sphi 0, %s198
    %s199 = sphi 0, %s196
    %s200 = sphi 0, %s199
    %s216 = sphi 0, %s200
    %s222 = sphi 0, %s224
    %s225 = sphi 0, %s222
    %s226 = sphi 0, %s225
    %s242 = sphi 0, %s226
    %s246 = sphi 0, %s246
    %s248 = sphi 0, %s246
    %s249 = sphi 0, %s248
    %s263 = sphi 0, %s249
    %s267 = sphi 0, %s267
    %s269 = sphi 0, %s267
    %s270 = sphi 0, %s269
    %s284 = sphi 0, %s270
    %s288 = sphi 0, %s288
    %s290 = sphi 0, %s288
    %s291 = sphi 0, %s290
    %s305 = sphi 0, %s291
    %s309 = sphi 0, %s309
    %s311 = sphi 0, %s309
    %s312 = sphi 0, %s311
    %s326 = sphi 0, %s312
  $region4: #{prefill_runner_forward.1} parent=0 // loop_header_branch
    %22 = sbr.rel (%p20) target = $region8
  $region5: #{prefill_runner_forward.1} parent=0 // loop_body
    %s24 = ssub.s32 %s19, 1
    %s25 = ssub.s32 %s19, 2
    %s26 = sadd.s32 %s19, 1
    %s28 = sadd.s32 %s27, 1
    %p31 = scmp.eq.s32.totalorder %s19, 1
    %p32 = scmp.ne.s32.totalorder %s27, %s29
    %p33 = scmp.eq.s32.totalorder %s19, 0
    %p34 = por %p32, %p33
    %p35 = scmp.ne.s32.totalorder %s27, %s29
    %p36 = scmp.eq.s32.totalorder %s24, 1
    %p37 = por %p35, %p36
    %p38 = scmp.ne.s32.totalorder %s29, %s30
    %p39 = scmp.eq.s32.totalorder %s24, 0
    %p40 = por %p38, %p39
    %p41 = scmp.ne.s32.totalorder %s29, %s30
    %p42 = scmp.eq.s32.totalorder %s25, 1
    %p43 = por %p41, %p42
    %p45 = scmp.ne.s32.totalorder %s30, %s44
    %p46 = scmp.eq.s32.totalorder %s25, 0
    %p47 = por %p45, %p46
    %s49 = sadd.s32 %s48, 1
    %p52 = scmp.eq.s32.totalorder %s19, 1
    %p53 = scmp.ne.s32.totalorder %s48, %s50
    %p54 = scmp.eq.s32.totalorder %s19, 0
    %p55 = por %p53, %p54
    %p56 = scmp.ne.s32.totalorder %s48, %s50
    %p57 = scmp.eq.s32.totalorder %s24, 1
    %p58 = por %p56, %p57
    %p59 = scmp.ne.s32.totalorder %s50, %s51
    %p60 = scmp.eq.s32.totalorder %s24, 0
    %p61 = por %p59, %p60
    %p62 = scmp.ne.s32.totalorder %s50, %s51
    %p63 = scmp.eq.s32.totalorder %s25, 1
    %p64 = por %p62, %p63
    %p66 = scmp.ne.s32.totalorder %s51, %s65
    %p67 = scmp.eq.s32.totalorder %s25, 0
    %p68 = por %p66, %p67
    %s70 = sadd.s32 %s69, 1
    %p73 = scmp.eq.s32.totalorder %s19, 1
    %p74 = scmp.ne.s32.totalorder %s69, %s71
    %p75 = scmp.eq.s32.totalorder %s19, 0
    %p76 = por %p74, %p75
    %p77 = scmp.ne.s32.totalorder %s69, %s71
    %p78 = scmp.eq.s32.totalorder %s24, 1
    %p79 = por %p77, %p78
    %p80 = scmp.ne.s32.totalorder %s71, %s72
    %p81 = scmp.eq.s32.totalorder %s24, 0
    %p82 = por %p80, %p81
    %p83 = scmp.ne.s32.totalorder %s71, %s72
    %p84 = scmp.eq.s32.totalorder %s25, 1
    %p85 = por %p83, %p84
    %p87 = scmp.ne.s32.totalorder %s72, %s86
    %p88 = scmp.eq.s32.totalorder %s25, 0
    %p89 = por %p87, %p88
    %s90 = ssub.s32 %s19, %s26
    %p91 = scmp.eq.s32.totalorder %s90, 0
    %s93 = sadd.s32 %s92, 1
    %s94 = scalar_select %p91, %s92, %s93
    %p97 = pneg %p91
    %p98 = scmp.eq.s32.totalorder %s19, 1
    %p99 = por %p97, %p98
    %p100 = scmp.ne.s32.totalorder %s92, %s95
    %p101 = scmp.eq.s32.totalorder %s19, 0
    %p102 = por %p100, %p101
    %p103 = scmp.ne.s32.totalorder %s92, %s95
    %p104 = scmp.eq.s32.totalorder %s24, 1
    %p105 = por %p103, %p104
    %p106 = scmp.ne.s32.totalorder %s95, %s96
    %p107 = scmp.eq.s32.totalorder %s24, 0
    %p108 = por %p106, %p107
    %p109 = scmp.ne.s32.totalorder %s95, %s96
    %p110 = scmp.eq.s32.totalorder %s25, 1
    %p111 = por %p109, %p110
    %p113 = scmp.ne.s32.totalorder %s96, %s112
    %p114 = scmp.eq.s32.totalorder %s25, 0
    %p115 = por %p113, %p114
    %s116 = ssub.s32 %s19, %s26
    %p117 = scmp.eq.s32.totalorder %s116, 0
    %s119 = sadd.s32 %s118, 1
    %s120 = scalar_select %p117, %s118, %s119
    %p123 = pneg %p117
    %p124 = scmp.eq.s32.totalorder %s19, 1
    %p125 = por %p123, %p124
    %p126 = scmp.ne.s32.totalorder %s118, %s121
    %p127 = scmp.eq.s32.totalorder %s19, 0
    %p128 = por %p126, %p127
    %p129 = scmp.ne.s32.totalorder %s118, %s121
    %p130 = scmp.eq.s32.totalorder %s24, 1
    %p131 = por %p129, %p130
    %p132 = scmp.ne.s32.totalorder %s121, %s122
    %p133 = scmp.eq.s32.totalorder %s24, 0
    %p134 = por %p132, %p133
    %p135 = scmp.ne.s32.totalorder %s121, %s122
    %p136 = scmp.eq.s32.totalorder %s25, 1
    %p137 = por %p135, %p136
    %p139 = scmp.ne.s32.totalorder %s122, %s138
    %p140 = scmp.eq.s32.totalorder %s25, 0
    %p141 = por %p139, %p140
    %s142 = ssub.s32 %s19, %s26
    %p143 = scmp.eq.s32.totalorder %s142, 0
    %s145 = sadd.s32 %s144, 1
    %s146 = scalar_select %p143, %s144, %s145
    %p149 = pneg %p143
    %p150 = scmp.eq.s32.totalorder %s19, 1
    %p151 = por %p149, %p150
    %p152 = scmp.ne.s32.totalorder %s144, %s147
    %p153 = scmp.eq.s32.totalorder %s19, 0
    %p154 = por %p152, %p153
    %p155 = scmp.ne.s32.totalorder %s144, %s147
    %p156 = scmp.eq.s32.totalorder %s24, 1
    %p157 = por %p155, %p156
    %p158 = scmp.ne.s32.totalorder %s147, %s148
    %p159 = scmp.eq.s32.totalorder %s24, 0
    %p160 = por %p158, %p159
    %p161 = scmp.ne.s32.totalorder %s147, %s148
    %p162 = scmp.eq.s32.totalorder %s25, 1
    %p163 = por %p161, %p162
    %p165 = scmp.ne.s32.totalorder %s148, %s164
    %p166 = scmp.eq.s32.totalorder %s25, 0
    %p167 = por %p165, %p166
    %s168 = ssub.s32 %s19, %s26
    %p169 = scmp.eq.s32.totalorder %s168, 0
    %s171 = sadd.s32 %s170, 1
    %s172 = scalar_select %p169, %s170, %s171
    %p175 = pneg %p169
    %p176 = scmp.eq.s32.totalorder %s19, 1
    %p177 = por %p175, %p176
    %p178 = scmp.ne.s32.totalorder %s170, %s173
    %p179 = scmp.eq.s32.totalorder %s19, 0
    %p180 = por %p178, %p179
    %p181 = scmp.ne.s32.totalorder %s170, %s173
    %p182 = scmp.eq.s32.totalorder %s24, 1
    %p183 = por %p181, %p182
    %p184 = scmp.ne.s32.totalorder %s173, %s174
    %p185 = scmp.eq.s32.totalorder %s24, 0
    %p186 = por %p184, %p185
    %p187 = scmp.ne.s32.totalorder %s173, %s174
    %p188 = scmp.eq.s32.totalorder %s25, 1
    %p189 = por %p187, %p188
    %p191 = scmp.ne.s32.totalorder %s174, %s190
    %p192 = scmp.eq.s32.totalorder %s25, 0
    %p193 = por %p191, %p192
    %s194 = ssub.s32 %s19, %s26
    %p195 = scmp.eq.s32.totalorder %s194, 0
    %s197 = sadd.s32 %s196, 1
    %s198 = scalar_select %p195, %s196, %s197
    %p201 = pneg %p195
    %p202 = scmp.eq.s32.totalorder %s19, 1
    %p203 = por %p201, %p202
    %p204 = scmp.ne.s32.totalorder %s196, %s199
    %p205 = scmp.eq.s32.totalorder %s19, 0
    %p206 = por %p204, %p205
    %p207 = scmp.ne.s32.totalorder %s196, %s199
    %p208 = scmp.eq.s32.totalorder %s24, 1
    %p209 = por %p207, %p208
    %p210 = scmp.ne.s32.totalorder %s199, %s200
    %p211 = scmp.eq.s32.totalorder %s24, 0
    %p212 = por %p210, %p211
    %p213 = scmp.ne.s32.totalorder %s199, %s200
    %p214 = scmp.eq.s32.totalorder %s25, 1
    %p215 = por %p213, %p214
    %p217 = scmp.ne.s32.totalorder %s200, %s216
    %p218 = scmp.eq.s32.totalorder %s25, 0
    %p219 = por %p217, %p218
    %s220 = ssub.s32 %s19, %s26
    %p221 = scmp.eq.s32.totalorder %s220, 0
    %s223 = sadd.s32 %s222, 1
    %s224 = scalar_select %p221, %s222, %s223
    %p227 = pneg %p221
    %p228 = scmp.eq.s32.totalorder %s19, 1
    %p229 = por %p227, %p228
    %p230 = scmp.ne.s32.totalorder %s222, %s225
    %p231 = scmp.eq.s32.totalorder %s19, 0
    %p232 = por %p230, %p231
    %p233 = scmp.ne.s32.totalorder %s222, %s225
    %p234 = scmp.eq.s32.totalorder %s24, 1
    %p235 = por %p233, %p234
    %p236 = scmp.ne.s32.totalorder %s225, %s226
    %p237 = scmp.eq.s32.totalorder %s24, 0
    %p238 = por %p236, %p237
    %p239 = scmp.ne.s32.totalorder %s225, %s226
    %p240 = scmp.eq.s32.totalorder %s25, 1
    %p241 = por %p239, %p240
    %p243 = scmp.ne.s32.totalorder %s226, %s242
    %p244 = scmp.eq.s32.totalorder %s25, 0
    %p245 = por %p243, %p244
    %s247 = sadd.s32 %s246, 1
    %p250 = scmp.eq.s32.totalorder %s19, 1
    %p251 = scmp.ne.s32.totalorder %s246, %s248
    %p252 = scmp.eq.s32.totalorder %s19, 0
    %p253 = por %p251, %p252
    %p254 = scmp.ne.s32.totalorder %s246, %s248
    %p255 = scmp.eq.s32.totalorder %s24, 1
    %p256 = por %p254, %p255
    %p257 = scmp.ne.s32.totalorder %s248, %s249
    %p258 = scmp.eq.s32.totalorder %s24, 0
    %p259 = por %p257, %p258
    %p260 = scmp.ne.s32.totalorder %s248, %s249
    %p261 = scmp.eq.s32.totalorder %s25, 1
    %p262 = por %p260, %p261
    %p264 = scmp.ne.s32.totalorder %s249, %s263
    %p265 = scmp.eq.s32.totalorder %s25, 0
    %p266 = por %p264, %p265
    %s268 = sadd.s32 %s267, 1
    %p271 = scmp.eq.s32.totalorder %s19, 1
    %p272 = scmp.ne.s32.totalorder %s267, %s269
    %p273 = scmp.eq.s32.totalorder %s19, 0
    %p274 = por %p272, %p273
    %p275 = scmp.ne.s32.totalorder %s267, %s269
    %p276 = scmp.eq.s32.totalorder %s24, 1
    %p277 = por %p275, %p276
    %p278 = scmp.ne.s32.totalorder %s269, %s270
    %p279 = scmp.eq.s32.totalorder %s24, 0
    %p280 = por %p278, %p279
    %p281 = scmp.ne.s32.totalorder %s269, %s270
    %p282 = scmp.eq.s32.totalorder %s25, 1
    %p283 = por %p281, %p282
    %p285 = scmp.ne.s32.totalorder %s270, %s284
    %p286 = scmp.eq.s32.totalorder %s25, 0
    %p287 = por %p285, %p286
    %s289 = sadd.s32 %s288, 1
    %p292 = scmp.eq.s32.totalorder %s19, 1
    %p293 = scmp.ne.s32.totalorder %s288, %s290
    %p294 = scmp.eq.s32.totalorder %s19, 0
    %p295 = por %p293, %p294
    %p296 = scmp.ne.s32.totalorder %s288, %s290
    %p297 = scmp.eq.s32.totalorder %s24, 1
    %p298 = por %p296, %p297
    %p299 = scmp.ne.s32.totalorder %s290, %s291
    %p300 = scmp.eq.s32.totalorder %s24, 0
    %p301 = por %p299, %p300
    %p302 = scmp.ne.s32.totalorder %s290, %s291
    %p303 = scmp.eq.s32.totalorder %s25, 1
    %p304 = por %p302, %p303
    %p306 = scmp.ne.s32.totalorder %s291, %s305
    %p307 = scmp.eq.s32.totalorder %s25, 0
    %p308 = por %p306, %p307
    %s310 = sadd.s32 %s309, 1
    %p313 = scmp.eq.s32.totalorder %s19, 1
    %p314 = scmp.ne.s32.totalorder %s309, %s311
    %p315 = scmp.eq.s32.totalorder %s19, 0
    %p316 = por %p314, %p315
    %p317 = scmp.ne.s32.totalorder %s309, %s311
    %p318 = scmp.eq.s32.totalorder %s24, 1
    %p319 = por %p317, %p318
    %p320 = scmp.ne.s32.totalorder %s311, %s312
    %p321 = scmp.eq.s32.totalorder %s24, 0
    %p322 = por %p320, %p321
    %p323 = scmp.ne.s32.totalorder %s311, %s312
    %p324 = scmp.eq.s32.totalorder %s25, 1
    %p325 = por %p323, %p324
    %p327 = scmp.ne.s32.totalorder %s312, %s326
    %p328 = scmp.eq.s32.totalorder %s25, 0
    %p329 = por %p327, %p328
    %p330 = scmp.le.s32.totalorder 1, %s19
    %p331 = scmp.lt.s32.totalorder %s19, 3
    %p332 = pnand %p330, %p331
    %p333 = pneg %p332
    // Predicated region
    $region9: #{prefill_runner_forward.1} parent=5 // pred_check
      _
    $region10: #{prefill_runner_forward.1} parent=5 // pred_check_branch
      %335 = sbr.rel (%p332) target = $region12
    $region11: #{prefill_runner_forward.1} parent=5 // pred_region
      %s336 = ssub.s32 %s19, 1
      // Predicated region
      $region13: #{prefill_runner_forward.1} parent=11 // pred_check
        %p337 = pneg %p40
      $region14: #{prefill_runner_forward.1} parent=11 // pred_check_branch
        %339 = sbr.rel (%p337) target = $region16
      $region15: #{prefill_runner_forward.1} parent=11 // pred_region
        _
      $region16: #{prefill_runner_forward.1} parent=11 // pred_fallthru
        _
      // Predicated region
      $region17: #{prefill_runner_forward.1} parent=11 // pred_check
        %p340 = pneg %p61
      $region18: #{prefill_runner_forward.1} parent=11 // pred_check_branch
        %342 = sbr.rel (%p340) target = $region20
      $region19: #{prefill_runner_forward.1} parent=11 // pred_region
        _
      $region20: #{prefill_runner_forward.1} parent=11 // pred_fallthru
        _
      // Predicated region
      $region21: #{prefill_runner_forward.1} parent=11 // pred_check
        %p343 = pneg %p82
      $region22: #{prefill_runner_forward.1} parent=11 // pred_check_branch
        %345 = sbr.rel (%p343) target = $region24
      $region23: #{prefill_runner_forward.1} parent=11 // pred_region
        _
      $region24: #{prefill_runner_forward.1} parent=11 // pred_fallthru
        _
      // Predicated region
      $region25: #{prefill_runner_forward.1} parent=11 // pred_check
        %p346 = pneg %p259
      $region26: #{prefill_runner_forward.1} parent=11 // pred_check_branch
        %348 = sbr.rel (%p346) target = $region28
      $region27: #{prefill_runner_forward.1} parent=11 // pred_region
        _
      $region28: #{prefill_runner_forward.1} parent=11 // pred_fallthru
        _
      // Predicated region
      $region29: #{prefill_runner_forward.1} parent=11 // pred_check
        %p349 = pneg %p280
      $region30: #{prefill_runner_forward.1} parent=11 // pred_check_branch
        %351 = sbr.rel (%p349) target = $region32
      $region31: #{prefill_runner_forward.1} parent=11 // pred_region
        _
      $region32: #{prefill_runner_forward.1} parent=11 // pred_fallthru
        _
    $region12: #{prefill_runner_forward.1} parent=5 // pred_fallthru
      _
    %p352 = scmp.lt.s32.totalorder %s19, 2
    // Predicated region
    $region33: #{prefill_runner_forward.1} parent=5 // pred_check
      %p353 = pneg %p352
    $region34: #{prefill_runner_forward.1} parent=5 // pred_check_branch
      %355 = sbr.rel (%p353) target = $region36
    $region35: #{prefill_runner_forward.1} parent=5 // pred_region
      // Predicated region
      $region37: #{prefill_runner_forward.1} parent=35 // pred_check
        %p356 = pneg %p102
      $region38: #{prefill_runner_forward.1} parent=35 // pred_check_branch
        %358 = sbr.rel (%p356) target = $region40
      $region39: #{prefill_runner_forward.1} parent=35 // pred_region
        %p359 = scmp.lt.s32.totalorder %s19, 1
        %s360 = scalar_select %p359, %s19, 1
        %s361 = scalar_lea.vmem %s3, %s360
      $region40: #{prefill_runner_forward.1} parent=35 // pred_fallthru
        _
      // Predicated region
      $region41: #{prefill_runner_forward.1} parent=35 // pred_check
        %p362 = pneg %p128
      $region42: #{prefill_runner_forward.1} parent=35 // pred_check_branch
        %364 = sbr.rel (%p362) target = $region44
      $region43: #{prefill_runner_forward.1} parent=35 // pred_region
        %p365 = scmp.lt.s32.totalorder %s19, 1
        %s366 = scalar_select %p365, %s19, 1
        %s367 = scalar_lea.vmem %s4, %s366
      $region44: #{prefill_runner_forward.1} parent=35 // pred_fallthru
        _
      // Predicated region
      $region45: #{prefill_runner_forward.1} parent=35 // pred_check
        %p368 = pneg %p154
      $region46: #{prefill_runner_forward.1} parent=35 // pred_check_branch
        %370 = sbr.rel (%p368) target = $region48
      $region47: #{prefill_runner_forward.1} parent=35 // pred_region
        %p371 = scmp.lt.s32.totalorder %s19, 1
        %s372 = scalar_select %p371, %s19, 1
        %s373 = smul.addr %s372, 8
        %s374 = smul.addr %s373, 4
        %s375 = scalar_lea.vmem %s5, %s374
      $region48: #{prefill_runner_forward.1} parent=35 // pred_fallthru
        _
      // Predicated region
      $region49: #{prefill_runner_forward.1} parent=35 // pred_check
        %p376 = pneg %p180
      $region50: #{prefill_runner_forward.1} parent=35 // pred_check_branch
        %378 = sbr.rel (%p376) target = $region52
      $region51: #{prefill_runner_forward.1} parent=35 // pred_region
        %p379 = scmp.lt.s32.totalorder %s19, 1
        %s380 = scalar_select %p379, %s19, 1
        %s381 = smul.addr %s380, 8
        %s382 = smul.addr %s381, 4
        %s383 = scalar_lea.vmem %s6, %s382
      $region52: #{prefill_runner_forward.1} parent=35 // pred_fallthru
        _
      // Predicated region
      $region53: #{prefill_runner_forward.1} parent=35 // pred_check
        %p384 = pneg %p206
      $region54: #{prefill_runner_forward.1} parent=35 // pred_check_branch
        %386 = sbr.rel (%p384) target = $region56
      $region55: #{prefill_runner_forward.1} parent=35 // pred_region
        %p387 = scmp.lt.s32.totalorder %s19, 1
        %s388 = scalar_select %p387, %s19, 1
        %s389 = smul.addr %s388, 16
        %s390 = smul.addr %s389, 4
        %s391 = scalar_lea.vmem %s7, %s390
      $region56: #{prefill_runner_forward.1} parent=35 // pred_fallthru
        _
      // Predicated region
      $region57: #{prefill_runner_forward.1} parent=35 // pred_check
        %p392 = pneg %p232
      $region58: #{prefill_runner_forward.1} parent=35 // pred_check_branch
        %394 = sbr.rel (%p392) target = $region60
      $region59: #{prefill_runner_forward.1} parent=35 // pred_region
        %p395 = scmp.lt.s32.totalorder %s19, 1
        %s396 = scalar_select %p395, %s19, 1
        %s397 = smul.addr %s396, 16
        %s398 = smul.addr %s397, 4
        %s399 = scalar_lea.vmem %s8, %s398
      $region60: #{prefill_runner_forward.1} parent=35 // pred_fallthru
        _
    $region36: #{prefill_runner_forward.1} parent=5 // pred_fallthru
      _
    %p400 = scmp.le.s32.totalorder 1, %s19
    %p401 = scmp.lt.s32.totalorder %s19, 3
    %p402 = pnand %p400, %p401
    %p403 = pneg %p402
    // Predicated region
    $region61: #{prefill_runner_forward.1} parent=5 // pred_check
      _
    $region62: #{prefill_runner_forward.1} parent=5 // pred_check_branch
      %405 = sbr.rel (%p402) target = $region64
    $region63: #{prefill_runner_forward.1} parent=5 // pred_region
      %s406 = ssub.s32 %s19, 1
      %p407 = pneg %p40
      %p408 = pneg %p37
      %p409 = pneg %p61
      %p410 = pneg %p58
      %p411 = pneg %p82
      %p412 = pneg %p79
      %p413 = scmp.lt.s32.totalorder %s24, 1
      %s414 = scalar_select %p413, %s24, 1
      %s415 = scalar_lea.vmem %s3, %s414
      %p416 = pneg %p108
      %p417 = pneg %p105
      %p418 = scmp.lt.s32.totalorder %s24, 1
      %s419 = scalar_select %p418, %s24, 1
      %s420 = scalar_lea.vmem %s4, %s419
      %p421 = pneg %p134
      %p422 = pneg %p131
      %p423 = scmp.lt.s32.totalorder %s24, 1
      %s424 = scalar_select %p423, %s24, 1
      %s425 = smul.addr %s424, 8
      %s426 = smul.addr %s425, 4
      %s427 = scalar_lea.vmem %s5, %s426
      %p428 = pneg %p160
      %p429 = pneg %p157
      %p430 = scmp.lt.s32.totalorder %s24, 1
      %s431 = scalar_select %p430, %s24, 1
      %s432 = smul.addr %s431, 8
      %s433 = smul.addr %s432, 4
      %s434 = scalar_lea.vmem %s6, %s433
      %p435 = pneg %p186
      %p436 = pneg %p183
      %p437 = scmp.lt.s32.totalorder %s24, 1
      %s438 = scalar_select %p437, %s24, 1
      %s439 = smul.addr %s438, 16
      %s440 = smul.addr %s439, 4
      %s441 = scalar_lea.vmem %s7, %s440
      %p442 = pneg %p212
      %p443 = pneg %p209
      %p444 = scmp.lt.s32.totalorder %s24, 1
      %s445 = scalar_select %p444, %s24, 1
      %s446 = smul.addr %s445, 16
      %s447 = smul.addr %s446, 4
      %s448 = scalar_lea.vmem %s8, %s447
      %p449 = pneg %p238
      %p450 = pneg %p235
      %p451 = pneg %p259
      %p452 = pneg %p256
      %p453 = pneg %p280
      %p454 = pneg %p277
      %p455 = pneg %p301
      %p456 = pneg %p298
      %p457 = pneg %p322
      %p458 = pneg %p319
      %p459 = scmp.lt.s32.totalorder %s24, 1
      %s460 = scalar_select %p459, %s24, 1
      %s461 = scalar_lea.vmem %s3, %s460
      %p462 = scmp.lt.s32.totalorder %s24, 1
      %s463 = scalar_select %p462, %s24, 1
      %s464 = scalar_lea.vmem %s4, %s463
      %p465 = scmp.lt.s32.totalorder %s24, 1
      %s466 = scalar_select %p465, %s24, 1
      %s467 = smul.addr %s466, 8
      %s468 = smul.addr %s467, 4
      %s469 = scalar_lea.vmem %s5, %s468
      %p470 = scmp.lt.s32.totalorder %s24, 1
      %s471 = scalar_select %p470, %s24, 1
      %s472 = smul.addr %s471, 8
      %s473 = smul.addr %s472, 4
      %s474 = scalar_lea.vmem %s6, %s473
      %p475 = scmp.lt.s32.totalorder %s24, 1
      %s476 = scalar_select %p475, %s24, 1
      %s477 = smul.addr %s476, 16
      %s478 = smul.addr %s477, 4
      %s479 = scalar_lea.vmem %s7, %s478
      %p480 = scmp.lt.s32.totalorder %s24, 1
      %s481 = scalar_select %p480, %s24, 1
      %s482 = smul.addr %s481, 16
      %s483 = smul.addr %s482, 4
      %s484 = scalar_lea.vmem %s8, %s483
      %p486 = scmp.eq.s32.totalorder %s24, 0
      // Predicated region
      $region65: #{prefill_runner_forward.1} parent=63 // pred_check
        %p487 = pneg %p486
      $region66: #{prefill_runner_forward.1} parent=63 // pred_check_branch
        %489 = sbr.rel (%p487) target = $region68
      $region67: #{prefill_runner_forward.1} parent=63 // pred_region
        %v490 = vld [vmem:[%s0] sm:$0xf]
        %v491 = vunpack.c.l.bf16 %v490
        %vm492 = vcmask 523264
        %493 = vst.msk [vmem:[#allocation2] sm:$0xff] %vm492, %v491
        %494 = vst.msk [vmem:[#allocation3] sm:$0xff] %vm492, 0.0
      $region68: #{prefill_runner_forward.1} parent=63 // pred_fallthru
        _
      %v495 = vld [vmem:[#allocation2] sm:$0xff]
      %v496 = vld [vmem:[#allocation3] sm:$0xff]
      %v497 = vadd.f32 %v495, %v496
      %v498 = vld [vmem:[%s461] sm:$0x1]
      %v499 = vmul.f32 %v497, %v497
      %vm500 = vcmask 523264
      %v501 = vsel %vm500, %v499, 0.0
      %502 = vadd.xlane.f32.xlu0 %v501
      %v503 = vpop.xlane.xlu0 %502
      %v504 = vrcp.pop 64.0
      %v505 = vmul.f32 %v503, %v504
      %v506 = vadd.f32 %v505, 1e-06
      %v507 = vrsqrt.pop %v506
      %v508 = vmul.f32 %v497, %v507
      %v510 = vlaneseq
      %v511 = vshrl.u32 %v510, 7
      %v512 = vsub.s32 0, %v511
      %v513 = vrot.slane %v498, %v512
      %v515 = vmul.f32 %v508, %v513
      %v516 = vpack.c.bf16 %v515, %v515
      %v517 = vld [vmem:[%s469] sm:$0xf]
      %v518 = vld [vmem:[%s469 + $0x4] sm:$0xf]
      %v519 = vld [vmem:[%s469 + $0x8] sm:$0xf]
      %v520 = vld [vmem:[%s469 + $0xc] sm:$0xf]
      %v521 = vld [vmem:[%s469 + $0x10] sm:$0xf]
      %v522 = vld [vmem:[%s469 + $0x14] sm:$0xf]
      %v523 = vld [vmem:[%s469 + $0x18] sm:$0xf]
      %v524 = vld [vmem:[%s469 + $0x1c] sm:$0xf]
      %v533 = vunpack.c.l.b16 %v517
      %v534 = vunpack.c.l.b16 %v518
      %v535 = vunpack.c.l.b16 %v519
      %v536 = vunpack.c.l.b16 %v520
      %v537 = vunpack.c.l.b16 %v521
      %v538 = vunpack.c.l.b16 %v522
      %v539 = vunpack.c.l.b16 %v523
      %v540 = vunpack.c.l.b16 %v524
      %v541 = vpack.c.b16 %v534, %v533
      %v542 = vpack.c.b16 %v536, %v535
      %v543 = vpack.c.b16 %v538, %v537
      %v544 = vpack.c.b16 %v540, %v539
      %v550 = vsel %vm500, %v516, 0
      %552 = vmatprep.subr.bf16.mxu0 0
      %553 = vmatpush1.bf16.msra.mxu0 %v541
      %554 = vmatprep.subr.bf16.mxu0 0
      %555 = vmatpush1.bf16.msra.mxu0 %v542
      %556 = vmatprep.subr.bf16.mxu0 0
      %557 = vmatpush1.bf16.msra.mxu0 %v543
      %558 = vmatprep.subr.bf16.mxu0 0
      %559 = vmatpush1.bf16.msra.mxu0 %v544
      %560 = vmatprep.subr.bf16.mxu0 0
      %561 = vmatpush1.bf16.msra.mxu0 0
      %562 = vmatprep.subr.bf16.mxu0 0
      %563 = vmatpush1.bf16.msra.mxu0 0
      %564 = vmatprep.subr.bf16.mxu0 0
      %565 = vmatpush1.bf16.msra.mxu0 0
      %566 = vmatprep.subr.bf16.mxu0 0
      %567 = vmatpush1.bf16.msra.mxu0 0
      %568 = vmatprep.subr.bf16.mxu0 0
      %569 = vmatpush1.bf16.msra.mxu0 0
      %570 = vmatprep.subr.bf16.mxu0 0
      %571 = vmatpush1.bf16.msra.mxu0 0
      %572 = vmatprep.subr.bf16.mxu0 0
      %573 = vmatpush1.bf16.msra.mxu0 0
      %574 = vmatprep.subr.bf16.mxu0 0
      %575 = vmatpush1.bf16.msra.mxu0 0
      %576 = vmatprep.subr.bf16.mxu0 0
      %577 = vmatpush1.bf16.msra.mxu0 0
      %578 = vmatprep.subr.bf16.mxu0 0
      %579 = vmatpush1.bf16.msra.mxu0 0
      %580 = vmatprep.subr.bf16.mxu0 0
      %581 = vmatpush1.bf16.msra.mxu0 0
      %582 = vmatprep.subr.bf16.mxu0 0
      %583 = vmatpush1.bf16.msra.mxu0 0
      %584 = vmatprep.mubr.bf16.mxu0 0
      %585 = vmatmul.mubr.bf16.gmra.mrb[0].mxu0 %v550
      %v586 = vpop.f32.mrb[0].mxu0
      %v587 = vadd.f32 0.0, %v586
      %v588 = vpop.f32.mrb[0].mxu0
      %v589 = vpop.f32.mrb[0].mxu0
      %v590 = vpop.f32.mrb[0].mxu0
      %591 = vdwg.mxu0
      %v592 = vld [vmem:[%s1] sm:$0xff]
      %s593 = scalar_lea.vmem %s1, 8
      %v594 = vld [vmem:[%s593] sm:$0xff]
      %s595 = scalar_lea.vmem %s1, 16
      %v596 = vld [vmem:[%s595] sm:$0xff]
      %597 = vrot.lane.b32.xlu0 %v587, 8
      %v598 = vpop.permute.xlu0 %597
      %599 = vrot.lane.b32.xlu0 %v587, 120
      %v600 = vpop.permute.xlu0 %599
      %v601 = vmul.f32 %v587, %v592
      %v602 = vmul.f32 %v598, %v594
      %v603 = vadd.f32 %v601, %v602
      %v604 = vmul.f32 %v600, %v596
      %v605 = vadd.f32 %v603, %v604
      %v606 = vlaneseq
      %v607 = vshrl.u32 %v606, 7
      %v608 = vlaneseq
      %v609 = vand.u32 %v608, 127
      %vm610 = vcmp.le.s32.totalorder %v609, %v607
      %612 = vrot.lane.b32.xlu0 %v605, 64
      %v613 = vpop.permute.xlu0 %612
      %vm614 = vcmask 130048
      %v615 = vsel %vm614, %v605, 0
      %v617 = vsel %vm614, %v613, 0
      %619 = vmatprep.subr.mxu0 0.0
      %620 = vmatpush1.xpose.msra.mxu0 %v617
      %621 = vmatprep.subr.mxu0 0.0
      %622 = vmatpush1.xpose.msra.mxu0 0.0
      %623 = vmatprep.subr.mxu0 0.0
      %624 = vmatpush1.xpose.msra.mxu0 0.0
      %625 = vmatprep.subr.mxu0 0.0
      %626 = vmatpush1.xpose.msra.mxu0 0.0
      %627 = vmatprep.subr.mxu0 0.0
      %628 = vmatpush1.xpose.msra.mxu0 0.0
      %629 = vmatprep.subr.mxu0 0.0
      %630 = vmatpush1.xpose.msra.mxu0 0.0
      %631 = vmatprep.subr.mxu0 0.0
      %632 = vmatpush1.xpose.msra.mxu0 0.0
      %633 = vmatprep.subr.mxu0 0.0
      %634 = vmatpush1.xpose.msra.mxu0 0.0
      %635 = vmatprep.subr.mxu0 0.0
      %636 = vmatpush1.xpose.msra.mxu0 0.0
      %637 = vmatprep.subr.mxu0 0.0
      %638 = vmatpush1.xpose.msra.mxu0 0.0
      %639 = vmatprep.subr.mxu0 0.0
      %640 = vmatpush1.xpose.msra.mxu0 0.0
      %641 = vmatprep.subr.mxu0 0.0
      %642 = vmatpush1.xpose.msra.mxu0 0.0
      %643 = vmatprep.subr.mxu0 0.0
      %644 = vmatpush1.xpose.msra.mxu0 0.0
      %645 = vmatprep.subr.mxu0 0.0
      %646 = vmatpush1.xpose.msra.mxu0 0.0
      %647 = vmatprep.subr.mxu0 0.0
      %648 = vmatpush1.xpose.msra.mxu0 0.0
      %649 = vmatprep.subr.mxu0 0.0
      %650 = vmatpush1.xpose.msra.mxu0 0.0
      %651 = vmatprep.subr.mxu0 0.0
      %652 = vmatpush1.xpose.msra.mxu0 0.0
      %653 = vmatprep.subr.mxu0 0.0
      %654 = vmatpush1.xpose.msra.mxu0 0.0
      %655 = vmatprep.subr.mxu0 0.0
      %656 = vmatpush1.xpose.msra.mxu0 0.0
      %657 = vmatprep.subr.mxu0 0.0
      %658 = vmatpush1.xpose.msra.mxu0 0.0
      %659 = vmatprep.subr.mxu0 0.0
      %660 = vmatpush1.xpose.msra.mxu0 0.0
      %661 = vmatprep.subr.mxu0 0.0
      %662 = vmatpush1.xpose.msra.mxu0 0.0
      %663 = vmatprep.subr.mxu0 0.0
      %664 = vmatpush1.xpose.msra.mxu0 0.0
      %665 = vmatprep.subr.mxu0 0.0
      %666 = vmatpush1.xpose.msra.mxu0 0.0
      %667 = vmatprep.subr.mxu0 0.0
      %668 = vmatpush1.xpose.msra.mxu0 0.0
      %669 = vmatprep.subr.mxu0 0.0
      %670 = vmatpush1.xpose.msra.mxu0 0.0
      %671 = vmatprep.subr.mxu0 0.0
      %672 = vmatpush1.xpose.msra.mxu0 0.0
      %673 = vmatprep.subr.mxu0 0.0
      %674 = vmatpush1.xpose.msra.mxu0 0.0
      %675 = vmatprep.subr.mxu0 0.0
      %676 = vmatpush1.xpose.msra.mxu0 0.0
      %677 = vmatprep.subr.mxu0 0.0
      %678 = vmatpush1.xpose.msra.mxu0 0.0
      %679 = vmatprep.subr.mxu0 0.0
      %680 = vmatpush1.xpose.msra.mxu0 0.0
      %681 = vmatprep.subr.mxu0 0.0
      %682 = vmatpush1.xpose.msra.mxu0 0.0
      %683 = vmatprep.mubr.f32.mxu0 0.0
      %684 = vmatmul.mubr.f32.gmra.mrb[0].mxu0 %v615
      %v685 = vpop.f32.mrb[0].mxu0
      %v686 = vadd.f32 0.0, %v685
      %v687 = vpop.f32.mrb[0].mxu0
      %688 = vdwg.mxu0
      %v689 = vsel %vm610, %v686, -1.7014117e+38
      %vm690 = vcmask 64512
      %v691 = vsel %vm690, %v689, -inf
      %692 = vmax.xlane.f32.xlu0 %v691
      %v693 = vpop.xlane.xlu0 %692
      %v694 = vsub.f32 %v689, %v693
      %v695 = vmul.f32 %v694, 1.442695
      %v696 = vpow.pop %v695
      %v697 = vsel %vm690, %v696, 0.0
      %698 = vadd.xlane.f32.xlu0 %v697
      %v699 = vpop.xlane.xlu0 %698
      %v700 = vrcp.pop %v699
      %v701 = vmul.f32 %v696, %v700
      %702 = vrot.lane.b32.xlu0 %v605, 32
      %v703 = vpop.permute.xlu0 %702
      %v706 = vsel %vm690, %v701, 0
      %708 = vmatprep.subr.mxu0 0.0
      %709 = vmatpush1.msra.mxu0 %v703
      %710 = vmatprep.subr.mxu0 0.0
      %711 = vmatpush1.msra.mxu0 0.0
      %712 = vmatprep.subr.mxu0 0.0
      %713 = vmatpush1.msra.mxu0 0.0
      %714 = vmatprep.subr.mxu0 0.0
      %715 = vmatpush1.msra.mxu0 0.0
      %716 = vmatprep.subr.mxu0 0.0
      %717 = vmatpush1.msra.mxu0 0.0
      %718 = vmatprep.subr.mxu0 0.0
      %719 = vmatpush1.msra.mxu0 0.0
      %720 = vmatprep.subr.mxu0 0.0
      %721 = vmatpush1.msra.mxu0 0.0
      %722 = vmatprep.subr.mxu0 0.0
      %723 = vmatpush1.msra.mxu0 0.0
      %724 = vmatprep.subr.mxu0 0.0
      %725 = vmatpush1.msra.mxu0 0.0
      %726 = vmatprep.subr.mxu0 0.0
      %727 = vmatpush1.msra.mxu0 0.0
      %728 = vmatprep.subr.mxu0 0.0
      %729 = vmatpush1.msra.mxu0 0.0
      %730 = vmatprep.subr.mxu0 0.0
      %731 = vmatpush1.msra.mxu0 0.0
      %732 = vmatprep.subr.mxu0 0.0
      %733 = vmatpush1.msra.mxu0 0.0
      %734 = vmatprep.subr.mxu0 0.0
      %735 = vmatpush1.msra.mxu0 0.0
      %736 = vmatprep.subr.mxu0 0.0
      %737 = vmatpush1.msra.mxu0 0.0
      %738 = vmatprep.subr.mxu0 0.0
      %739 = vmatpush1.msra.mxu0 0.0
      %740 = vmatprep.subr.mxu0 0.0
      %741 = vmatpush1.msra.mxu0 0.0
      %742 = vmatprep.subr.mxu0 0.0
      %743 = vmatpush1.msra.mxu0 0.0
      %744 = vmatprep.subr.mxu0 0.0
      %745 = vmatpush1.msra.mxu0 0.0
      %746 = vmatprep.subr.mxu0 0.0
      %747 = vmatpush1.msra.mxu0 0.0
      %748 = vmatprep.subr.mxu0 0.0
      %749 = vmatpush1.msra.mxu0 0.0
      %750 = vmatprep.subr.mxu0 0.0
      %751 = vmatpush1.msra.mxu0 0.0
      %752 = vmatprep.subr.mxu0 0.0
      %753 = vmatpush1.msra.mxu0 0.0
      %754 = vmatprep.subr.mxu0 0.0
      %755 = vmatpush1.msra.mxu0 0.0
      %756 = vmatprep.subr.mxu0 0.0
      %757 = vmatpush1.msra.mxu0 0.0
      %758 = vmatprep.subr.mxu0 0.0
      %759 = vmatpush1.msra.mxu0 0.0
      %760 = vmatprep.subr.mxu0 0.0
      %761 = vmatpush1.msra.mxu0 0.0
      %762 = vmatprep.subr.mxu0 0.0
      %763 = vmatpush1.msra.mxu0 0.0
      %764 = vmatprep.subr.mxu0 0.0
      %765 = vmatpush1.msra.mxu0 0.0
      %766 = vmatprep.subr.mxu0 0.0
      %767 = vmatpush1.msra.mxu0 0.0
      %768 = vmatprep.subr.mxu0 0.0
      %769 = vmatpush1.msra.mxu0 0.0
      %770 = vmatprep.subr.mxu0 0.0
      %771 = vmatpush1.msra.mxu0 0.0
      %772 = vmatprep.mubr.f32.mxu0 0.0
      %773 = vmatmul.mubr.f32.gmra.mrb[0].mxu0 %v706
      %v774 = vpop.f32.mrb[0].mxu0
      %v775 = vadd.f32 0.0, %v774
      %v776 = vpop.f32.mrb[0].mxu0
      %777 = vdwg.mxu0
      %778 = vst.msk [vmem:[#allocation4] sm:$0xff] %vm614, %v775
      %779 = vrot.lane.b32.xlu0 %v605, 112
      %v780 = vpop.permute.xlu0 %779
      %v781 = vsel %vm614, %v780, 0
      %783 = vmatprep.subr.mxu0 0.0
      %784 = vmatpush1.xpose.msra.mxu0 %v617
      %785 = vmatprep.subr.mxu0 0.0
      %786 = vmatpush1.xpose.msra.mxu0 0.0
      %787 = vmatprep.subr.mxu0 0.0
      %788 = vmatpush1.xpose.msra.mxu0 0.0
      %789 = vmatprep.subr.mxu0 0.0
      %790 = vmatpush1.xpose.msra.mxu0 0.0
      %791 = vmatprep.subr.mxu0 0.0
      %792 = vmatpush1.xpose.msra.mxu0 0.0
      %793 = vmatprep.subr.mxu0 0.0
      %794 = vmatpush1.xpose.msra.mxu0 0.0
      %795 = vmatprep.subr.mxu0 0.0
      %796 = vmatpush1.xpose.msra.mxu0 0.0
      %797 = vmatprep.subr.mxu0 0.0
      %798 = vmatpush1.xpose.msra.mxu0 0.0
      %799 = vmatprep.subr.mxu0 0.0
      %800 = vmatpush1.xpose.msra.mxu0 0.0
      %801 = vmatprep.subr.mxu0 0.0
      %802 = vmatpush1.xpose.msra.mxu0 0.0
      %803 = vmatprep.subr.mxu0 0.0
      %804 = vmatpush1.xpose.msra.mxu0 0.0
      %805 = vmatprep.subr.mxu0 0.0
      %806 = vmatpush1.xpose.msra.mxu0 0.0
      %807 = vmatprep.subr.mxu0 0.0
      %808 = vmatpush1.xpose.msra.mxu0 0.0
      %809 = vmatprep.subr.mxu0 0.0
      %810 = vmatpush1.xpose.msra.mxu0 0.0
      %811 = vmatprep.subr.mxu0 0.0
      %812 = vmatpush1.xpose.msra.mxu0 0.0
      %813 = vmatprep.subr.mxu0 0.0
      %814 = vmatpush1.xpose.msra.mxu0 0.0
      %815 = vmatprep.subr.mxu0 0.0
      %816 = vmatpush1.xpose.msra.mxu0 0.0
      %817 = vmatprep.subr.mxu0 0.0
      %818 = vmatpush1.xpose.msra.mxu0 0.0
      %819 = vmatprep.subr.mxu0 0.0
      %820 = vmatpush1.xpose.msra.mxu0 0.0
      %821 = vmatprep.subr.mxu0 0.0
      %822 = vmatpush1.xpose.msra.mxu0 0.0
      %823 = vmatprep.subr.mxu0 0.0
      %824 = vmatpush1.xpose.msra.mxu0 0.0
      %825 = vmatprep.subr.mxu0 0.0
      %826 = vmatpush1.xpose.msra.mxu0 0.0
      %827 = vmatprep.subr.mxu0 0.0
      %828 = vmatpush1.xpose.msra.mxu0 0.0
      %829 = vmatprep.subr.mxu0 0.0
      %830 = vmatpush1.xpose.msra.mxu0 0.0
      %831 = vmatprep.subr.mxu0 0.0
      %832 = vmatpush1.xpose.msra.mxu0 0.0
      %833 = vmatprep.subr.mxu0 0.0
      %834 = vmatpush1.xpose.msra.mxu0 0.0
      %835 = vmatprep.subr.mxu0 0.0
      %836 = vmatpush1.xpose.msra.mxu0 0.0
      %837 = vmatprep.subr.mxu0 0.0
      %838 = vmatpush1.xpose.msra.mxu0 0.0
      %839 = vmatprep.subr.mxu0 0.0
      %840 = vmatpush1.xpose.msra.mxu0 0.0
      %841 = vmatprep.subr.mxu0 0.0
      %842 = vmatpush1.xpose.msra.mxu0 0.0
      %843 = vmatprep.subr.mxu0 0.0
      %844 = vmatpush1.xpose.msra.mxu0 0.0
      %845 = vmatprep.subr.mxu0 0.0
      %846 = vmatpush1.xpose.msra.mxu0 0.0
      %847 = vmatprep.mubr.f32.mxu0 0.0
      %848 = vmatmul.mubr.f32.gmra.mrb[0].mxu0 %v781
      %v849 = vpop.f32.mrb[0].mxu0
      %v850 = vadd.f32 0.0, %v849
      %v851 = vpop.f32.mrb[0].mxu0
      %852 = vdwg.mxu0
      %v853 = vsel %vm610, %v850, -1.7014117e+38
      %v854 = vsel %vm690, %v853, -inf
      %855 = vmax.xlane.f32.xlu0 %v854
      %v856 = vpop.xlane.xlu0 %855
      %v857 = vsub.f32 %v853, %v856
      %v858 = vmul.f32 %v857, 1.442695
      %v859 = vpow.pop %v858
      %v860 = vsel %vm690, %v859, 0.0
      %861 = vadd.xlane.f32.xlu0 %v860
      %v862 = vpop.xlane.xlu0 %861
      %v863 = vrcp.pop %v862
      %v864 = vmul.f32 %v859, %v863
      %v866 = vsel %vm690, %v864, 0
      %868 = vmatprep.subr.mxu0 0.0
      %869 = vmatpush1.msra.mxu0 %v703
      %870 = vmatprep.subr.mxu0 0.0
      %871 = vmatpush1.msra.mxu0 0.0
      %872 = vmatprep.subr.mxu0 0.0
      %873 = vmatpush1.msra.mxu0 0.0
      %874 = vmatprep.subr.mxu0 0.0
      %875 = vmatpush1.msra.mxu0 0.0
      %876 = vmatprep.subr.mxu0 0.0
      %877 = vmatpush1.msra.mxu0 0.0
      %878 = vmatprep.subr.mxu0 0.0
      %879 = vmatpush1.msra.mxu0 0.0
      %880 = vmatprep.subr.mxu0 0.0
      %881 = vmatpush1.msra.mxu0 0.0
      %882 = vmatprep.subr.mxu0 0.0
      %883 = vmatpush1.msra.mxu0 0.0
      %884 = vmatprep.subr.mxu0 0.0
      %885 = vmatpush1.msra.mxu0 0.0
      %886 = vmatprep.subr.mxu0 0.0
      %887 = vmatpush1.msra.mxu0 0.0
      %888 = vmatprep.subr.mxu0 0.0
      %889 = vmatpush1.msra.mxu0 0.0
      %890 = vmatprep.subr.mxu0 0.0
      %891 = vmatpush1.msra.mxu0 0.0
      %892 = vmatprep.subr.mxu0 0.0
      %893 = vmatpush1.msra.mxu0 0.0
      %894 = vmatprep.subr.mxu0 0.0
      %895 = vmatpush1.msra.mxu0 0.0
      %896 = vmatprep.subr.mxu0 0.0
      %897 = vmatpush1.msra.mxu0 0.0
      %898 = vmatprep.subr.mxu0 0.0
      %899 = vmatpush1.msra.mxu0 0.0
      %900 = vmatprep.subr.mxu0 0.0
      %901 = vmatpush1.msra.mxu0 0.0
      %902 = vmatprep.subr.mxu0 0.0
      %903 = vmatpush1.msra.mxu0 0.0
      %904 = vmatprep.subr.mxu0 0.0
      %905 = vmatpush1.msra.mxu0 0.0
      %906 = vmatprep.subr.mxu0 0.0
      %907 = vmatpush1.msra.mxu0 0.0
      %908 = vmatprep.subr.mxu0 0.0
      %909 = vmatpush1.msra.mxu0 0.0
      %910 = vmatprep.subr.mxu0 0.0
      %911 = vmatpush1.msra.mxu0 0.0
      %912 = vmatprep.subr.mxu0 0.0
      %913 = vmatpush1.msra.mxu0 0.0
      %914 = vmatprep.subr.mxu0 0.0
      %915 = vmatpush1.msra.mxu0 0.0
      %916 = vmatprep.subr.mxu0 0.0
      %917 = vmatpush1.msra.mxu0 0.0
      %918 = vmatprep.subr.mxu0 0.0
      %919 = vmatpush1.msra.mxu0 0.0
      %920 = vmatprep.subr.mxu0 0.0
      %921 = vmatpush1.msra.mxu0 0.0
      %922 = vmatprep.subr.mxu0 0.0
      %923 = vmatpush1.msra.mxu0 0.0
      %924 = vmatprep.subr.mxu0 0.0
      %925 = vmatpush1.msra.mxu0 0.0
      %926 = vmatprep.subr.mxu0 0.0
      %927 = vmatpush1.msra.mxu0 0.0
      %928 = vmatprep.subr.mxu0 0.0
      %929 = vmatpush1.msra.mxu0 0.0
      %930 = vmatprep.subr.mxu0 0.0
      %931 = vmatpush1.msra.mxu0 0.0
      %932 = vmatprep.mubr.f32.mxu0 0.0
      %933 = vmatmul.mubr.f32.gmra.mrb[0].mxu0 %v866
      %v934 = vpop.f32.mrb[0].mxu0
      %v935 = vadd.f32 0.0, %v934
      %v936 = vpop.f32.mrb[0].mxu0
      %937 = vdwg.mxu0
      %939 = vrot.lane.b32.xlu0 %v935, 16
      %v940 = vpop.permute.xlu0 %939
      %vm942 = vcmask 261248
      %943 = vst.msk [vmem:[#allocation4] sm:$0xff] %vm942, %v940
      %944 = vrot.lane.b32.xlu0 %v605, 96
      %v945 = vpop.permute.xlu0 %944
      %946 = vrot.lane.b32.xlu0 %v605, 48
      %v947 = vpop.permute.xlu0 %946
      %v948 = vsel %vm614, %v945, 0
      %v950 = vsel %vm614, %v947, 0
      %952 = vmatprep.subr.mxu0 0.0
      %953 = vmatpush1.xpose.msra.mxu0 %v950
      %954 = vmatprep.subr.mxu0 0.0
      %955 = vmatpush1.xpose.msra.mxu0 0.0
      %956 = vmatprep.subr.mxu0 0.0
      %957 = vmatpush1.xpose.msra.mxu0 0.0
      %958 = vmatprep.subr.mxu0 0.0
      %959 = vmatpush1.xpose.msra.mxu0 0.0
      %960 = vmatprep.subr.mxu0 0.0
      %961 = vmatpush1.xpose.msra.mxu0 0.0
      %962 = vmatprep.subr.mxu0 0.0
      %963 = vmatpush1.xpose.msra.mxu0 0.0
      %964 = vmatprep.subr.mxu0 0.0
      %965 = vmatpush1.xpose.msra.mxu0 0.0
      %966 = vmatprep.subr.mxu0 0.0
      %967 = vmatpush1.xpose.msra.mxu0 0.0
      %968 = vmatprep.subr.mxu0 0.0
      %969 = vmatpush1.xpose.msra.mxu0 0.0
      %970 = vmatprep.subr.mxu0 0.0
      %971 = vmatpush1.xpose.msra.mxu0 0.0
      %972 = vmatprep.subr.mxu0 0.0
      %973 = vmatpush1.xpose.msra.mxu0 0.0
      %974 = vmatprep.subr.mxu0 0.0
      %975 = vmatpush1.xpose.msra.mxu0 0.0
      %976 = vmatprep.subr.mxu0 0.0
      %977 = vmatpush1.xpose.msra.mxu0 0.0
      %978 = vmatprep.subr.mxu0 0.0
      %979 = vmatpush1.xpose.msra.mxu0 0.0
      %980 = vmatprep.subr.mxu0 0.0
      %981 = vmatpush1.xpose.msra.mxu0 0.0
      %982 = vmatprep.subr.mxu0 0.0
      %983 = vmatpush1.xpose.msra.mxu0 0.0
      %984 = vmatprep.subr.mxu0 0.0
      %985 = vmatpush1.xpose.msra.mxu0 0.0
      %986 = vmatprep.subr.mxu0 0.0
      %987 = vmatpush1.xpose.msra.mxu0 0.0
      %988 = vmatprep.subr.mxu0 0.0
      %989 = vmatpush1.xpose.msra.mxu0 0.0
      %990 = vmatprep.subr.mxu0 0.0
      %991 = vmatpush1.xpose.msra.mxu0 0.0
      %992 = vmatprep.subr.mxu0 0.0
      %993 = vmatpush1.xpose.msra.mxu0 0.0
      %994 = vmatprep.subr.mxu0 0.0
      %995 = vmatpush1.xpose.msra.mxu0 0.0
      %996 = vmatprep.subr.mxu0 0.0
      %997 = vmatpush1.xpose.msra.mxu0 0.0
      %998 = vmatprep.subr.mxu0 0.0
      %999 = vmatpush1.xpose.msra.mxu0 0.0
      %1000 = vmatprep.subr.mxu0 0.0
      %1001 = vmatpush1.xpose.msra.mxu0 0.0
      %1002 = vmatprep.subr.mxu0 0.0
      %1003 = vmatpush1.xpose.msra.mxu0 0.0
      %1004 = vmatprep.subr.mxu0 0.0
      %1005 = vmatpush1.xpose.msra.mxu0 0.0
      %1006 = vmatprep.subr.mxu0 0.0
      %1007 = vmatpush1.xpose.msra.mxu0 0.0
      %1008 = vmatprep.subr.mxu0 0.0
      %1009 = vmatpush1.xpose.msra.mxu0 0.0
      %1010 = vmatprep.subr.mxu0 0.0
      %1011 = vmatpush1.xpose.msra.mxu0 0.0
      %1012 = vmatprep.subr.mxu0 0.0
      %1013 = vmatpush1.xpose.msra.mxu0 0.0
      %1014 = vmatprep.subr.mxu0 0.0
      %1015 = vmatpush1.xpose.msra.mxu0 0.0
      %1016 = vmatprep.mubr.f32.mxu0 0.0
      %1017 = vmatmul.mubr.f32.gmra.mrb[0].mxu0 %v948
      %v1018 = vpop.f32.mrb[0].mxu0
      %v1019 = vadd.f32 0.0, %v1018
      %v1020 = vpop.f32.mrb[0].mxu0
      %1021 = vdwg.mxu0
      %v1022 = vsel %vm610, %v1019, -1.7014117e+38
      %v1023 = vsel %vm690, %v1022, -inf
      %1024 = vmax.xlane.f32.xlu0 %v1023
      %v1025 = vpop.xlane.xlu0 %1024
      %v1026 = vsub.f32 %v1022, %v1025
      %v1027 = vmul.f32 %v1026, 1.442695
      %v1028 = vpow.pop %v1027
      %v1029 = vsel %vm690, %v1028, 0.0
      %1030 = vadd.xlane.f32.xlu0 %v1029
      %v1031 = vpop.xlane.xlu0 %1030
      %v1032 = vrcp.pop %v1031
      %v1033 = vmul.f32 %v1028, %v1032
      %1034 = vrot.lane.b32.xlu0 %v605, 16
      %v1035 = vpop.permute.xlu0 %1034
      %v1038 = vsel %vm690, %v1033, 0
      %1040 = vmatprep.subr.mxu0 0.0
      %1041 = vmatpush1.msra.mxu0 %v1035
      %1042 = vmatprep.subr.mxu0 0.0
      %1043 = vmatpush1.msra.mxu0 0.0
      %1044 = vmatprep.subr.mxu0 0.0
      %1045 = vmatpush1.msra.mxu0 0.0
      %1046 = vmatprep.subr.mxu0 0.0
      %1047 = vmatpush1.msra.mxu0 0.0
      %1048 = vmatprep.subr.mxu0 0.0
      %1049 = vmatpush1.msra.mxu0 0.0
      %1050 = vmatprep.subr.mxu0 0.0
      %1051 = vmatpush1.msra.mxu0 0.0
      %1052 = vmatprep.subr.mxu0 0.0
      %1053 = vmatpush1.msra.mxu0 0.0
      %1054 = vmatprep.subr.mxu0 0.0
      %1055 = vmatpush1.msra.mxu0 0.0
      %1056 = vmatprep.subr.mxu0 0.0
      %1057 = vmatpush1.msra.mxu0 0.0
      %1058 = vmatprep.subr.mxu0 0.0
      %1059 = vmatpush1.msra.mxu0 0.0
      %1060 = vmatprep.subr.mxu0 0.0
      %1061 = vmatpush1.msra.mxu0 0.0
      %1062 = vmatprep.subr.mxu0 0.0
      %1063 = vmatpush1.msra.mxu0 0.0
      %1064 = vmatprep.subr.mxu0 0.0
      %1065 = vmatpush1.msra.mxu0 0.0
      %1066 = vmatprep.subr.mxu0 0.0
      %1067 = vmatpush1.msra.mxu0 0.0
      %1068 = vmatprep.subr.mxu0 0.0
      %1069 = vmatpush1.msra.mxu0 0.0
      %1070 = vmatprep.subr.mxu0 0.0
      %1071 = vmatpush1.msra.mxu0 0.0
      %1072 = vmatprep.subr.mxu0 0.0
      %1073 = vmatpush1.msra.mxu0 0.0
      %1074 = vmatprep.subr.mxu0 0.0
      %1075 = vmatpush1.msra.mxu0 0.0
      %1076 = vmatprep.subr.mxu0 0.0
      %1077 = vmatpush1.msra.mxu0 0.0
      %1078 = vmatprep.subr.mxu0 0.0
      %1079 = vmatpush1.msra.mxu0 0.0
      %1080 = vmatprep.subr.mxu0 0.0
      %1081 = vmatpush1.msra.mxu0 0.0
      %1082 = vmatprep.subr.mxu0 0.0
      %1083 = vmatpush1.msra.mxu0 0.0
      %1084 = vmatprep.subr.mxu0 0.0
      %1085 = vmatpush1.msra.mxu0 0.0
      %1086 = vmatprep.subr.mxu0 0.0
      %1087 = vmatpush1.msra.mxu0 0.0
      %1088 = vmatprep.subr.mxu0 0.0
      %1089 = vmatpush1.msra.mxu0 0.0
      %1090 = vmatprep.subr.mxu0 0.0
      %1091 = vmatpush1.msra.mxu0 0.0
      %1092 = vmatprep.subr.mxu0 0.0
      %1093 = vmatpush1.msra.mxu0 0.0
      %1094 = vmatprep.subr.mxu0 0.0
      %1095 = vmatpush1.msra.mxu0 0.0
      %1096 = vmatprep.subr.mxu0 0.0
      %1097 = vmatpush1.msra.mxu0 0.0
      %1098 = vmatprep.subr.mxu0 0.0
      %1099 = vmatpush1.msra.mxu0 0.0
      %1100 = vmatprep.subr.mxu0 0.0
      %1101 = vmatpush1.msra.mxu0 0.0
      %1102 = vmatprep.subr.mxu0 0.0
      %1103 = vmatpush1.msra.mxu0 0.0
      %1104 = vmatprep.mubr.f32.mxu0 0.0
      %1105 = vmatmul.mubr.f32.gmra.mrb[0].mxu0 %v1038
      %v1106 = vpop.f32.mrb[0].mxu0
      %v1107 = vadd.f32 0.0, %v1106
      %v1108 = vpop.f32.mrb[0].mxu0
      %1109 = vdwg.mxu0
      %1111 = vrot.lane.b32.xlu0 %v1107, 32
      %v1112 = vpop.permute.xlu0 %1111
      %vm1114 = vcmask 392448
      %1115 = vst.msk [vmem:[#allocation4] sm:$0xff] %vm1114, %v1112
      %1116 = vrot.lane.b32.xlu0 %v605, 80
      %v1117 = vpop.permute.xlu0 %1116
      %v1118 = vsel %vm614, %v1117, 0
      %1120 = vmatprep.subr.mxu0 0.0
      %1121 = vmatpush1.xpose.msra.mxu0 %v950
      %1122 = vmatprep.subr.mxu0 0.0
      %1123 = vmatpush1.xpose.msra.mxu0 0.0
      %1124 = vmatprep.subr.mxu0 0.0
      %1125 = vmatpush1.xpose.msra.mxu0 0.0
      %1126 = vmatprep.subr.mxu0 0.0
      %1127 = vmatpush1.xpose.msra.mxu0 0.0
      %1128 = vmatprep.subr.mxu0 0.0
      %1129 = vmatpush1.xpose.msra.mxu0 0.0
      %1130 = vmatprep.subr.mxu0 0.0
      %1131 = vmatpush1.xpose.msra.mxu0 0.0
      %1132 = vmatprep.subr.mxu0 0.0
      %1133 = vmatpush1.xpose.msra.mxu0 0.0
      %1134 = vmatprep.subr.mxu0 0.0
      %1135 = vmatpush1.xpose.msra.mxu0 0.0
      %1136 = vmatprep.subr.mxu0 0.0
      %1137 = vmatpush1.xpose.msra.mxu0 0.0
      %1138 = vmatprep.subr.mxu0 0.0
      %1139 = vmatpush1.xpose.msra.mxu0 0.0
      %1140 = vmatprep.subr.mxu0 0.0
      %1141 = vmatpush1.xpose.msra.mxu0 0.0
      %1142 = vmatprep.subr.mxu0 0.0
      %1143 = vmatpush1.xpose.msra.mxu0 0.0
      %1144 = vmatprep.subr.mxu0 0.0
      %1145 = vmatpush1.xpose.msra.mxu0 0.0
      %1146 = vmatprep.subr.mxu0 0.0
      %1147 = vmatpush1.xpose.msra.mxu0 0.0
      %1148 = vmatprep.subr.mxu0 0.0
      %1149 = vmatpush1.xpose.msra.mxu0 0.0
      %1150 = vmatprep.subr.mxu0 0.0
      %1151 = vmatpush1.xpose.msra.mxu0 0.0
      %1152 = vmatprep.subr.mxu0 0.0
      %1153 = vmatpush1.xpose.msra.mxu0 0.0
      %1154 = vmatprep.subr.mxu0 0.0
      %1155 = vmatpush1.xpose.msra.mxu0 0.0
      %1156 = vmatprep.subr.mxu0 0.0
      %1157 = vmatpush1.xpose.msra.mxu0 0.0
      %1158 = vmatprep.subr.mxu0 0.0
      %1159 = vmatpush1.xpose.msra.mxu0 0.0
      %1160 = vmatprep.subr.mxu0 0.0
      %1161 = vmatpush1.xpose.msra.mxu0 0.0
      %1162 = vmatprep.subr.mxu0 0.0
      %1163 = vmatpush1.xpose.msra.mxu0 0.0
      %1164 = vmatprep.subr.mxu0 0.0
      %1165 = vmatpush1.xpose.msra.mxu0 0.0
      %1166 = vmatprep.subr.mxu0 0.0
      %1167 = vmatpush1.xpose.msra.mxu0 0.0
      %1168 = vmatprep.subr.mxu0 0.0
      %1169 = vmatpush1.xpose.msra.mxu0 0.0
      %1170 = vmatprep.subr.mxu0 0.0
      %1171 = vmatpush1.xpose.msra.mxu0 0.0
      %1172 = vmatprep.subr.mxu0 0.0
      %1173 = vmatpush1.xpose.msra.mxu0 0.0
      %1174 = vmatprep.subr.mxu0 0.0
      %1175 = vmatpush1.xpose.msra.mxu0 0.0
      %1176 = vmatprep.subr.mxu0 0.0
      %1177 = vmatpush1.xpose.msra.mxu0 0.0
      %1178 = vmatprep.subr.mxu0 0.0
      %1179 = vmatpush1.xpose.msra.mxu0 0.0
      %1180 = vmatprep.subr.mxu0 0.0
      %1181 = vmatpush1.xpose.msra.mxu0 0.0
      %1182 = vmatprep.subr.mxu0 0.0
      %1183 = vmatpush1.xpose.msra.mxu0 0.0
      %1184 = vmatprep.mubr.f32.mxu0 0.0
      %1185 = vmatmul.mubr.f32.gmra.mrb[0].mxu0 %v1118
      %v1186 = vpop.f32.mrb[0].mxu0
      %v1187 = vadd.f32 0.0, %v1186
      %v1188 = vpop.f32.mrb[0].mxu0
      %1189 = vdwg.mxu0
      %v1190 = vsel %vm610, %v1187, -1.7014117e+38
      %v1191 = vsel %vm690, %v1190, -inf
      %1192 = vmax.xlane.f32.xlu0 %v1191
      %v1193 = vpop.xlane.xlu0 %1192
      %v1194 = vsub.f32 %v1190, %v1193
      %v1195 = vmul.f32 %v1194, 1.442695
      %v1196 = vpow.pop %v1195
      %v1197 = vsel %vm690, %v1196, 0.0
      %1198 = vadd.xlane.f32.xlu0 %v1197
      %v1199 = vpop.xlane.xlu0 %1198
      %v1200 = vrcp.pop %v1199
      %v1201 = vmul.f32 %v1196, %v1200
      %v1203 = vsel %vm690, %v1201, 0
      %1205 = vmatprep.subr.mxu0 0.0
      %1206 = vmatpush1.msra.mxu0 %v1035
      %1207 = vmatprep.subr.mxu0 0.0
      %1208 = vmatpush1.msra.mxu0 0.0
      %1209 = vmatprep.subr.mxu0 0.0
      %1210 = vmatpush1.msra.mxu0 0.0
      %1211 = vmatprep.subr.mxu0 0.0
      %1212 = vmatpush1.msra.mxu0 0.0
      %1213 = vmatprep.subr.mxu0 0.0
      %1214 = vmatpush1.msra.mxu0 0.0
      %1215 = vmatprep.subr.mxu0 0.0
      %1216 = vmatpush1.msra.mxu0 0.0
      %1217 = vmatprep.subr.mxu0 0.0
      %1218 = vmatpush1.msra.mxu0 0.0
      %1219 = vmatprep.subr.mxu0 0.0
      %1220 = vmatpush1.msra.mxu0 0.0
      %1221 = vmatprep.subr.mxu0 0.0
      %1222 = vmatpush1.msra.mxu0 0.0
      %1223 = vmatprep.subr.mxu0 0.0
      %1224 = vmatpush1.msra.mxu0 0.0
      %1225 = vmatprep.subr.mxu0 0.0
      %1226 = vmatpush1.msra.mxu0 0.0
      %1227 = vmatprep.subr.mxu0 0.0
      %1228 = vmatpush1.msra.mxu0 0.0
      %1229 = vmatprep.subr.mxu0 0.0
      %1230 = vmatpush1.msra.mxu0 0.0
      %1231 = vmatprep.subr.mxu0 0.0
      %1232 = vmatpush1.msra.mxu0 0.0
      %1233 = vmatprep.subr.mxu0 0.0
      %1234 = vmatpush1.msra.mxu0 0.0
      %1235 = vmatprep.subr.mxu0 0.0
      %1236 = vmatpush1.msra.mxu0 0.0
      %1237 = vmatprep.subr.mxu0 0.0
      %1238 = vmatpush1.msra.mxu0 0.0
      %1239 = vmatprep.subr.mxu0 0.0
      %1240 = vmatpush1.msra.mxu0 0.0
      %1241 = vmatprep.subr.mxu0 0.0
      %1242 = vmatpush1.msra.mxu0 0.0
      %1243 = vmatprep.subr.mxu0 0.0
      %1244 = vmatpush1.msra.mxu0 0.0
      %1245 = vmatprep.subr.mxu0 0.0
      %1246 = vmatpush1.msra.mxu0 0.0
      %1247 = vmatprep.subr.mxu0 0.0
      %1248 = vmatpush1.msra.mxu0 0.0
      %1249 = vmatprep.subr.mxu0 0.0
      %1250 = vmatpush1.msra.mxu0 0.0
      %1251 = vmatprep.subr.mxu0 0.0
      %1252 = vmatpush1.msra.mxu0 0.0
      %1253 = vmatprep.subr.mxu0 0.0
      %1254 = vmatpush1.msra.mxu0 0.0
      %1255 = vmatprep.subr.mxu0 0.0
      %1256 = vmatpush1.msra.mxu0 0.0
      %1257 = vmatprep.subr.mxu0 0.0
      %1258 = vmatpush1.msra.mxu0 0.0
      %1259 = vmatprep.subr.mxu0 0.0
      %1260 = vmatpush1.msra.mxu0 0.0
      %1261 = vmatprep.subr.mxu0 0.0
      %1262 = vmatpush1.msra.mxu0 0.0
      %1263 = vmatprep.subr.mxu0 0.0
      %1264 = vmatpush1.msra.mxu0 0.0
      %1265 = vmatprep.subr.mxu0 0.0
      %1266 = vmatpush1.msra.mxu0 0.0
      %1267 = vmatprep.subr.mxu0 0.0
      %1268 = vmatpush1.msra.mxu0 0.0
      %1269 = vmatprep.mubr.f32.mxu0 0.0
      %1270 = vmatmul.mubr.f32.gmra.mrb[0].mxu0 %v1203
      %v1271 = vpop.f32.mrb[0].mxu0
      %v1272 = vadd.f32 0.0, %v1271
      %v1273 = vpop.f32.mrb[0].mxu0
      %1274 = vdwg.mxu0
      %1276 = vrot.lane.b32.xlu0 %v1272, 48
      %v1277 = vpop.permute.xlu0 %1276
      %vm1279 = vcmask 523648
      %1280 = vst.msk [vmem:[#allocation4] sm:$0xff] %vm1279, %v1277
      %v1281 = vld [vmem:[#allocation4] sm:$0xff]
      %v1282 = vpack.c.bf16 %v1281, %v1281
      %v1283 = vld [vmem:[%s474] sm:$0xf]
      %v1284 = vld [vmem:[%s474 + $0x4] sm:$0xf]
      %v1285 = vld [vmem:[%s474 + $0x8] sm:$0xf]
      %v1286 = vld [vmem:[%s474 + $0xc] sm:$0xf]
      %v1287 = vld [vmem:[%s474 + $0x10] sm:$0xf]
      %v1288 = vld [vmem:[%s474 + $0x14] sm:$0xf]
      %v1289 = vld [vmem:[%s474 + $0x18] sm:$0xf]
      %v1290 = vld [vmem:[%s474 + $0x1c] sm:$0xf]
      %v1299 = vunpack.c.l.b16 %v1283
      %v1300 = vunpack.c.l.b16 %v1284
      %v1301 = vunpack.c.l.b16 %v1285
      %v1302 = vunpack.c.l.b16 %v1286
      %v1303 = vunpack.c.l.b16 %v1287
      %v1304 = vunpack.c.l.b16 %v1288
      %v1305 = vunpack.c.l.b16 %v1289
      %v1306 = vunpack.c.l.b16 %v1290
      %v1307 = vpack.c.b16 %v1300, %v1299
      %v1308 = vpack.c.b16 %v1302, %v1301
      %v1309 = vpack.c.b16 %v1304, %v1303
      %v1310 = vpack.c.b16 %v1306, %v1305
      %v1316 = vsel %vm500, %v1282, 0
      %1318 = vmatprep.subr.bf16.mxu0 0
      %1319 = vmatpush1.bf16.msra.mxu0 %v1307
      %1320 = vmatprep.subr.bf16.mxu0 0
      %1321 = vmatpush1.bf16.msra.mxu0 %v1308
      %1322 = vmatprep.subr.bf16.mxu0 0
      %1323 = vmatpush1.bf16.msra.mxu0 %v1309
      %1324 = vmatprep.subr.bf16.mxu0 0
      %1325 = vmatpush1.bf16.msra.mxu0 %v1310
      %1326 = vmatprep.subr.bf16.mxu0 0
      %1327 = vmatpush1.bf16.msra.mxu0 0
      %1328 = vmatprep.subr.bf16.mxu0 0
      %1329 = vmatpush1.bf16.msra.mxu0 0
      %1330 = vmatprep.subr.bf16.mxu0 0
      %1331 = vmatpush1.bf16.msra.mxu0 0
      %1332 = vmatprep.subr.bf16.mxu0 0
      %1333 = vmatpush1.bf16.msra.mxu0 0
      %1334 = vmatprep.subr.bf16.mxu0 0
      %1335 = vmatpush1.bf16.msra.mxu0 0
      %1336 = vmatprep.subr.bf16.mxu0 0
      %1337 = vmatpush1.bf16.msra.mxu0 0
      %1338 = vmatprep.subr.bf16.mxu0 0
      %1339 = vmatpush1.bf16.msra.mxu0 0
      %1340 = vmatprep.subr.bf16.mxu0 0
      %1341 = vmatpush1.bf16.msra.mxu0 0
      %1342 = vmatprep.subr.bf16.mxu0 0
      %1343 = vmatpush1.bf16.msra.mxu0 0
      %1344 = vmatprep.subr.bf16.mxu0 0
      %1345 = vmatpush1.bf16.msra.mxu0 0
      %1346 = vmatprep.subr.bf16.mxu0 0
      %1347 = vmatpush1.bf16.msra.mxu0 0
      %1348 = vmatprep.subr.bf16.mxu0 0
      %1349 = vmatpush1.bf16.msra.mxu0 0
      %1350 = vmatprep.mubr.bf16.mxu0 0
      %1351 = vmatmul.mubr.bf16.gmra.mrb[0].mxu0 %v1316
      %v1352 = vpop.f32.mrb[0].mxu0
      %v1353 = vadd.f32 0.0, %v1352
      %v1354 = vpop.f32.mrb[0].mxu0
      %v1355 = vpop.f32.mrb[0].mxu0
      %v1356 = vpop.f32.mrb[0].mxu0
      %1357 = vdwg.mxu0
      %v1358 = vadd.f32 %v497, %v1353
      %v1359 = vld [vmem:[%s464] sm:$0x1]
      %v1360 = vmul.f32 %v1358, %v1358
      %v1361 = vsel %vm500, %v1360, 0.0
      %1362 = vadd.xlane.f32.xlu0 %v1361
      %v1363 = vpop.xlane.xlu0 %1362
      %v1364 = vmul.f32 %v1363, %v504
      %v1365 = vadd.f32 %v1364, 1e-06
      %v1366 = vrsqrt.pop %v1365
      %v1367 = vmul.f32 %v1358, %v1366
      %v1369 = vlaneseq
      %v1370 = vshrl.u32 %v1369, 7
      %v1371 = vsub.s32 0, %v1370
      %v1372 = vrot.slane %v1359, %v1371
      %v1374 = vmul.f32 %v1367, %v1372
      %v1375 = vpack.c.bf16 %v1374, %v1374
      %v1376 = vld [vmem:[%s479] sm:$0xff]
      %v1377 = vld [vmem:[%s479 + $0x8] sm:$0xff]
      %v1378 = vld [vmem:[%s479 + $0x10] sm:$0xff]
      %v1379 = vld [vmem:[%s479 + $0x18] sm:$0xff]
      %v1380 = vld [vmem:[%s479 + $0x20] sm:$0xff]
      %v1381 = vld [vmem:[%s479 + $0x28] sm:$0xff]
      %v1382 = vld [vmem:[%s479 + $0x30] sm:$0xff]
      %v1383 = vld [vmem:[%s479 + $0x38] sm:$0xff]
      %v1392 = vunpack.c.l.b16 %v1376
      %v1393 = vunpack.c.h.b16 %v1376
      %v1394 = vunpack.c.l.b16 %v1377
      %v1395 = vunpack.c.h.b16 %v1377
      %v1396 = vunpack.c.l.b16 %v1378
      %v1397 = vunpack.c.h.b16 %v1378
      %v1398 = vunpack.c.l.b16 %v1379
      %v1399 = vunpack.c.h.b16 %v1379
      %v1400 = vunpack.c.l.b16 %v1380
      %v1401 = vunpack.c.h.b16 %v1380
      %v1402 = vunpack.c.l.b16 %v1381
      %v1403 = vunpack.c.h.b16 %v1381
      %v1404 = vunpack.c.l.b16 %v1382
      %v1405 = vunpack.c.h.b16 %v1382
      %v1406 = vunpack.c.l.b16 %v1383
      %v1407 = vunpack.c.h.b16 %v1383
      %v1408 = vpack.c.b16 %v1394, %v1392
      %v1409 = vpack.c.b16 %v1395, %v1393
      %v1410 = vpack.c.b16 %v1398, %v1396
      %v1411 = vpack.c.b16 %v1399, %v1397
      %v1412 = vpack.c.b16 %v1402, %v1400
      %v1413 = vpack.c.b16 %v1403, %v1401
      %v1414 = vpack.c.b16 %v1406, %v1404
      %v1415 = vpack.c.b16 %v1407, %v1405
      %v1425 = vsel %vm500, %v1375, 0
      %1427 = vmatprep.subr.bf16.mxu0 %v1409
      %1428 = vmatpush1.bf16.msra.mxu0 %v1408
      %1429 = vmatprep.subr.bf16.mxu0 %v1411
      %1430 = vmatpush1.bf16.msra.mxu0 %v1410
      %1431 = vmatprep.subr.bf16.mxu0 %v1413
      %1432 = vmatpush1.bf16.msra.mxu0 %v1412
      %1433 = vmatprep.subr.bf16.mxu0 %v1415
      %1434 = vmatpush1.bf16.msra.mxu0 %v1414
      %1435 = vmatprep.subr.bf16.mxu0 0
      %1436 = vmatpush1.bf16.msra.mxu0 0
      %1437 = vmatprep.subr.bf16.mxu0 0
      %1438 = vmatpush1.bf16.msra.mxu0 0
      %1439 = vmatprep.subr.bf16.mxu0 0
      %1440 = vmatpush1.bf16.msra.mxu0 0
      %1441 = vmatprep.subr.bf16.mxu0 0
      %1442 = vmatpush1.bf16.msra.mxu0 0
      %1443 = vmatprep.subr.bf16.mxu0 0
      %1444 = vmatpush1.bf16.msra.mxu0 0
      %1445 = vmatprep.subr.bf16.mxu0 0
      %1446 = vmatpush1.bf16.msra.mxu0 0
      %1447 = vmatprep.subr.bf16.mxu0 0
      %1448 = vmatpush1.bf16.msra.mxu0 0
      %1449 = vmatprep.subr.bf16.mxu0 0
      %1450 = vmatpush1.bf16.msra.mxu0 0
      %1451 = vmatprep.subr.bf16.mxu0 0
      %1452 = vmatpush1.bf16.msra.mxu0 0
      %1453 = vmatprep.subr.bf16.mxu0 0
      %1454 = vmatpush1.bf16.msra.mxu0 0
      %1455 = vmatprep.subr.bf16.mxu0 0
      %1456 = vmatpush1.bf16.msra.mxu0 0
      %1457 = vmatprep.subr.bf16.mxu0 0
      %1458 = vmatpush1.bf16.msra.mxu0 0
      %1459 = vmatprep.mubr.bf16.mxu0 0
      %1460 = vmatmul.mubr.bf16.gmra.mrb[0].mxu0 %v1425
      %v1461 = vpop.f32.mrb[0].mxu0
      %v1462 = vadd.f32 0.0, %v1461
      %v1463 = vpop.f32.mrb[0].mxu0
      %v1464 = vadd.f32 0.0, %v1463
      %v1465 = vpop.f32.mrb[0].mxu0
      %v1466 = vpop.f32.mrb[0].mxu0
      %1467 = vdwg.mxu0
      %v1468 = vxor.u32 %v1462, 2147483648
      %v1469 = vmul.f32 %v1468, 1.442695
      %v1470 = vpow.pop %v1469
      %v1471 = vadd.f32 %v1470, 1.0
      %v1472 = vrcp.pop %v1471
      %v1473 = vmul.f32 1.0, %v1472
      %v1474 = vmul.f32 %v1462, %v1473
      %v1475 = vmul.f32 %v1474, %v1464
      %v1476 = vpack.c.bf16 %v1475, %v1475
      %v1477 = vld [vmem:[%s484] sm:$0xf]
      %v1478 = vld [vmem:[%s484 + $0x4] sm:$0xf]
      %v1479 = vld [vmem:[%s484 + $0x8] sm:$0xf]
      %v1480 = vld [vmem:[%s484 + $0xc] sm:$0xf]
      %v1481 = vld [vmem:[%s484 + $0x10] sm:$0xf]
      %v1482 = vld [vmem:[%s484 + $0x14] sm:$0xf]
      %v1483 = vld [vmem:[%s484 + $0x18] sm:$0xf]
      %v1484 = vld [vmem:[%s484 + $0x1c] sm:$0xf]
      %v1485 = vld [vmem:[%s484 + $0x20] sm:$0xf]
      %v1486 = vld [vmem:[%s484 + $0x24] sm:$0xf]
      %v1487 = vld [vmem:[%s484 + $0x28] sm:$0xf]
      %v1488 = vld [vmem:[%s484 + $0x2c] sm:$0xf]
      %v1489 = vld [vmem:[%s484 + $0x30] sm:$0xf]
      %v1490 = vld [vmem:[%s484 + $0x34] sm:$0xf]
      %v1491 = vld [vmem:[%s484 + $0x38] sm:$0xf]
      %v1492 = vld [vmem:[%s484 + $0x3c] sm:$0xf]
      %v1509 = vunpack.c.l.b16 %v1477
      %v1510 = vunpack.c.l.b16 %v1478
      %v1511 = vunpack.c.l.b16 %v1479
      %v1512 = vunpack.c.l.b16 %v1480
      %v1513 = vunpack.c.l.b16 %v1481
      %v1514 = vunpack.c.l.b16 %v1482
      %v1515 = vunpack.c.l.b16 %v1483
      %v1516 = vunpack.c.l.b16 %v1484
      %v1517 = vunpack.c.l.b16 %v1485
      %v1518 = vunpack.c.l.b16 %v1486
      %v1519 = vunpack.c.l.b16 %v1487
      %v1520 = vunpack.c.l.b16 %v1488
      %v1521 = vunpack.c.l.b16 %v1489
      %v1522 = vunpack.c.l.b16 %v1490
      %v1523 = vunpack.c.l.b16 %v1491
      %v1524 = vunpack.c.l.b16 %v1492
      %v1525 = vpack.c.b16 %v1510, %v1509
      %v1526 = vpack.c.b16 %v1512, %v1511
      %v1527 = vpack.c.b16 %v1514, %v1513
      %v1528 = vpack.c.b16 %v1516, %v1515
      %v1529 = vpack.c.b16 %v1518, %v1517
      %v1530 = vpack.c.b16 %v1520, %v1519
      %v1531 = vpack.c.b16 %v1522, %v1521
      %v1532 = vpack.c.b16 %v1524, %v1523
      %1541 = vmatprep.subr.bf16.mxu0 0
      %1542 = vmatpush1.bf16.msra.mxu0 %v1525
      %1543 = vmatprep.subr.bf16.mxu0 0
      %1544 = vmatpush1.bf16.msra.mxu0 %v1526
      %1545 = vmatprep.subr.bf16.mxu0 0
      %1546 = vmatpush1.bf16.msra.mxu0 %v1527
      %1547 = vmatprep.subr.bf16.mxu0 0
      %1548 = vmatpush1.bf16.msra.mxu0 %v1528
      %1549 = vmatprep.subr.bf16.mxu0 0
      %1550 = vmatpush1.bf16.msra.mxu0 %v1529
      %1551 = vmatprep.subr.bf16.mxu0 0
      %1552 = vmatpush1.bf16.msra.mxu0 %v1530
      %1553 = vmatprep.subr.bf16.mxu0 0
      %1554 = vmatpush1.bf16.msra.mxu0 %v1531
      %1555 = vmatprep.subr.bf16.mxu0 0
      %1556 = vmatpush1.bf16.msra.mxu0 %v1532
      %1557 = vmatprep.subr.bf16.mxu0 0
      %1558 = vmatpush1.bf16.msra.mxu0 0
      %1559 = vmatprep.subr.bf16.mxu0 0
      %1560 = vmatpush1.bf16.msra.mxu0 0
      %1561 = vmatprep.subr.bf16.mxu0 0
      %1562 = vmatpush1.bf16.msra.mxu0 0
      %1563 = vmatprep.subr.bf16.mxu0 0
      %1564 = vmatpush1.bf16.msra.mxu0 0
      %1565 = vmatprep.subr.bf16.mxu0 0
      %1566 = vmatpush1.bf16.msra.mxu0 0
      %1567 = vmatprep.subr.bf16.mxu0 0
      %1568 = vmatpush1.bf16.msra.mxu0 0
      %1569 = vmatprep.subr.bf16.mxu0 0
      %1570 = vmatpush1.bf16.msra.mxu0 0
      %1571 = vmatprep.subr.bf16.mxu0 0
      %1572 = vmatpush1.bf16.msra.mxu0 0
      %1573 = vmatprep.mubr.bf16.mxu0 0
      %1574 = vmatmul.mubr.bf16.gmra.mrb[0].mxu0 %v1476
      %v1575 = vpop.f32.mrb[0].mxu0
      %v1576 = vadd.f32 0.0, %v1575
      %v1577 = vpop.f32.mrb[0].mxu0
      %v1578 = vpop.f32.mrb[0].mxu0
      %v1579 = vpop.f32.mrb[0].mxu0
      %1580 = vdwg.mxu0
      %1581 = vst.msk [vmem:[#allocation2] sm:$0xff] %vm500, %v1576
      %1582 = vst.msk [vmem:[#allocation3] sm:$0xff] %vm500, %v1358
      %p1583 = scmp.eq.s32.totalorder %s24, 1
      // Predicated region
      $region69: #{prefill_runner_forward.1} parent=63 // pred_check
        %p1584 = pneg %p1583
      $region70: #{prefill_runner_forward.1} parent=63 // pred_check_branch
        %1586 = sbr.rel (%p1584) target = $region72
      $region71: #{prefill_runner_forward.1} parent=63 // pred_region
        %v1587 = vpack.c.bf16 %v1576, %v1576
        %vm1588 = vcmask 519168
        %1589 = vst.msk [vmem:[%s11] sm:$0xf] %vm1588, %v1587
        %v1590 = vpack.c.bf16 %v1358, %v1358
        %v1592 = vunpack.c.l.b16 %v1590
        %v1593 = vpack.c.b16 %v1592, %v1592
        %1594 = vrot.lane.b32.xlu0 %v1593, 64
        %v1595 = vpop.permute.xlu0 %1594
        %vm1597 = vcmask 1043968
        %1598 = vst.msk [vmem:[%s11] sm:$0xf] %vm1597, %v1595
        %v1599 = vadd.f32 %v1576, %v1358
        %v1600 = vld [vmem:[%s9] sm:$0x1]
        %v1601 = vmul.f32 %v1599, %v1599
        %v1602 = vsel %vm500, %v1601, 0.0
        %1603 = vadd.xlane.f32.xlu0 %v1602
        %v1604 = vpop.xlane.xlu0 %1603
        %v1605 = vmul.f32 %v1604, %v504
        %v1606 = vadd.f32 %v1605, 1e-06
        %v1607 = vrsqrt.pop %v1606
        %v1608 = vmul.f32 %v1599, %v1607
        %v1610 = vlaneseq
        %v1611 = vshrl.u32 %v1610, 7
        %v1612 = vsub.s32 0, %v1611
        %v1613 = vrot.slane %v1600, %v1612
        %v1615 = vmul.f32 %v1608, %v1613
        %v1616 = vpack.c.bf16 %v1615, %v1615
        %v1617 = vld [vmem:[%s10] sm:$0xf]
        %v1618 = vld [vmem:[%s10 + $0x4] sm:$0xf]
        %v1619 = vld [vmem:[%s10 + $0x8] sm:$0xf]
        %v1620 = vld [vmem:[%s10 + $0xc] sm:$0xf]
        %v1621 = vld [vmem:[%s10 + $0x10] sm:$0xf]
        %v1622 = vld [vmem:[%s10 + $0x14] sm:$0xf]
        %v1623 = vld [vmem:[%s10 + $0x18] sm:$0xf]
        %v1624 = vld [vmem:[%s10 + $0x1c] sm:$0xf]
        %v1633 = vunpack.c.l.b16 %v1617
        %v1634 = vunpack.c.l.b16 %v1618
        %v1635 = vunpack.c.l.b16 %v1619
        %v1636 = vunpack.c.l.b16 %v1620
        %v1637 = vunpack.c.l.b16 %v1621
        %v1638 = vunpack.c.l.b16 %v1622
        %v1639 = vunpack.c.l.b16 %v1623
        %v1640 = vunpack.c.l.b16 %v1624
        %v1641 = vpack.c.b16 %v1634, %v1633
        %v1642 = vpack.c.b16 %v1636, %v1635
        %v1643 = vpack.c.b16 %v1638, %v1637
        %v1644 = vpack.c.b16 %v1640, %v1639
        %v1650 = vsel %vm500, %v1616, 0
        %1652 = vmatprep.subr.bf16.mxu0 0
        %1653 = vmatpush1.bf16.msra.mxu0 %v1641
        %1654 = vmatprep.subr.bf16.mxu0 0
        %1655 = vmatpush1.bf16.msra.mxu0 %v1642
        %1656 = vmatprep.subr.bf16.mxu0 0
        %1657 = vmatpush1.bf16.msra.mxu0 %v1643
        %1658 = vmatprep.subr.bf16.mxu0 0
        %1659 = vmatpush1.bf16.msra.mxu0 %v1644
        %1660 = vmatprep.subr.bf16.mxu0 0
        %1661 = vmatpush1.bf16.msra.mxu0 0
        %1662 = vmatprep.subr.bf16.mxu0 0
        %1663 = vmatpush1.bf16.msra.mxu0 0
        %1664 = vmatprep.subr.bf16.mxu0 0
        %1665 = vmatpush1.bf16.msra.mxu0 0
        %1666 = vmatprep.subr.bf16.mxu0 0
        %1667 = vmatpush1.bf16.msra.mxu0 0
        %1668 = vmatprep.subr.bf16.mxu0 0
        %1669 = vmatpush1.bf16.msra.mxu0 0
        %1670 = vmatprep.subr.bf16.mxu0 0
        %1671 = vmatpush1.bf16.msra.mxu0 0
        %1672 = vmatprep.subr.bf16.mxu0 0
        %1673 = vmatpush1.bf16.msra.mxu0 0
        %1674 = vmatprep.subr.bf16.mxu0 0
        %1675 = vmatpush1.bf16.msra.mxu0 0
        %1676 = vmatprep.subr.bf16.mxu0 0
        %1677 = vmatpush1.bf16.msra.mxu0 0
        %1678 = vmatprep.subr.bf16.mxu0 0
        %1679 = vmatpush1.bf16.msra.mxu0 0
        %1680 = vmatprep.subr.bf16.mxu0 0
        %1681 = vmatpush1.bf16.msra.mxu0 0
        %1682 = vmatprep.subr.bf16.mxu0 0
        %1683 = vmatpush1.bf16.msra.mxu0 0
        %1684 = vmatprep.mubr.bf16.mxu0 0
        %1685 = vmatmul.mubr.bf16.gmra.mrb[0].mxu0 %v1650
        %v1686 = vpop.f32.mrb[0].mxu0
        %v1687 = vadd.f32 0.0, %v1686
        %v1688 = vpop.f32.mrb[0].mxu0
        %v1689 = vpop.f32.mrb[0].mxu0
        %v1690 = vpop.f32.mrb[0].mxu0
        %1691 = vdwg.mxu0
        %v1692 = vld [vmem:[%s2] sm:$0xff]
        %s1693 = scalar_lea.vmem %s2, 8
        %v1694 = vld [vmem:[%s1693] sm:$0xff]
        %s1695 = scalar_lea.vmem %s2, 16
        %v1696 = vld [vmem:[%s1695] sm:$0xff]
        %1697 = vrot.lane.b32.xlu0 %v1687, 8
        %v1698 = vpop.permute.xlu0 %1697
        %1699 = vrot.lane.b32.xlu0 %v1687, 120
        %v1700 = vpop.permute.xlu0 %1699
        %v1701 = vmul.f32 %v1687, %v1692
        %v1702 = vmul.f32 %v1698, %v1694
        %v1703 = vadd.f32 %v1701, %v1702
        %v1704 = vmul.f32 %v1700, %v1696
        %v1705 = vadd.f32 %v1703, %v1704
        %v1706 = vpack.c.bf16 %v1705, %v1705
        %1707 = vst [vmem:[%s12] sm:$0xf] %v1706
      $region72: #{prefill_runner_forward.1} parent=63 // pred_fallthru
        _
      // Predicated region
      $region73: #{prefill_runner_forward.1} parent=63 // pred_check
        %p1708 = pneg %p298
      $region74: #{prefill_runner_forward.1} parent=63 // pred_check_branch
        %1710 = sbr.rel (%p1708) target = $region76
      $region75: #{prefill_runner_forward.1} parent=63 // pred_region
        _
      $region76: #{prefill_runner_forward.1} parent=63 // pred_fallthru
        _
      // Predicated region
      $region77: #{prefill_runner_forward.1} parent=63 // pred_check
        %p1711 = pneg %p319
      $region78: #{prefill_runner_forward.1} parent=63 // pred_check_branch
        %1713 = sbr.rel (%p1711) target = $region80
      $region79: #{prefill_runner_forward.1} parent=63 // pred_region
        _
      $region80: #{prefill_runner_forward.1} parent=63 // pred_fallthru
        _
      // Predicated region
      $region81: #{prefill_runner_forward.1} parent=63 // pred_check
        %p1714 = pneg %p298
      $region82: #{prefill_runner_forward.1} parent=63 // pred_check_branch
        %1716 = sbr.rel (%p1714) target = $region84
      $region83: #{prefill_runner_forward.1} parent=63 // pred_region
        _
      $region84: #{prefill_runner_forward.1} parent=63 // pred_fallthru
        _
      // Predicated region
      $region85: #{prefill_runner_forward.1} parent=63 // pred_check
        %p1717 = pneg %p319
      $region86: #{prefill_runner_forward.1} parent=63 // pred_check_branch
        %1719 = sbr.rel (%p1717) target = $region88
      $region87: #{prefill_runner_forward.1} parent=63 // pred_region
        _
      $region88: #{prefill_runner_forward.1} parent=63 // pred_fallthru
        _
    $region64: #{prefill_runner_forward.1} parent=5 // pred_fallthru
      _
    %p1720 = scmp.le.s32.totalorder 2, %s19
    // Predicated region
    $region89: #{prefill_runner_forward.1} parent=5 // pred_check
      %p1721 = pneg %p1720
    $region90: #{prefill_runner_forward.1} parent=5 // pred_check_branch
      %1723 = sbr.rel (%p1721) target = $region92
    $region91: #{prefill_runner_forward.1} parent=5 // pred_region
      %s1724 = ssub.s32 %s19, 2
    $region92: #{prefill_runner_forward.1} parent=5 // pred_fallthru
      _
  $region6: #{prefill_runner_forward.1} parent=0 // loop_footer
    %s23 = sadd.s32 1, %s19
  $region7: #{prefill_runner_forward.1} parent=0 // loop_footer_branch
    %18 = sbr.rel target = $region3
  $region8: #{prefill_runner_forward.1} parent=0 // loop_exit
    _

</llo_original>
